<compile_context>
chip_gen: v5e
topology: v5e:2x2
jax: 0.10.0
libtpu: 0.0.40
codegen_flags: <defaults>
</compile_context>

<pallas_src>
import functools
import math

import jax
import jax.numpy as jnp
from jax.experimental import pallas as pl
from jax.experimental.pallas import tpu as pltpu

_LANE = 128
_SUBLANE = 8
_VMEM_TILE_BUDGET = 28 * 1024 * 1024   # v7x-safe working-set ceiling (64 MiB physical)


def _round_up(x, m):
    return (x + m - 1) // m * m


def _choose_tile_n(N, K, fin, fout, x_itemsize, block_n, budget):
    """Pick the N tile: large (amortise ~0.35us/step), minimal tail waste,
    >=2 grid steps when possible (v7x megacore), and within the VMEM budget."""
    fin_p = _round_up(fin, _LANE)
    fout_p = _round_up(fout, _LANE)
    # Double-buffered per-row cost: K input streams (stream dtype) + f32 output.
    row_bytes = 2 * K * fin_p * x_itemsize + 2 * fout_p * 4
    # Resident cost: W (still allocated with 2 buffers despite the constant
    # index_map) + the tiny (2,Fin) ws table.
    fixed_bytes = 2 * fin_p * fout_p * x_itemsize + 2 * _SUBLANE * fin_p * 4
    tn_cap = max(((budget - fixed_bytes) // row_bytes) // _SUBLANE * _SUBLANE,
                 _SUBLANE)

    block = max(min(block_n, tn_cap), _SUBLANE)
    steps = pl.cdiv(N, block)
    if steps < 2 and N >= 2 * _SUBLANE:
        steps = 2                         # keep both v7x TensorCores busy
    tn = min(_round_up(pl.cdiv(N, steps), _SUBLANE), block)
    if tn >= N:
        tn = N                            # single full-extent block along N
    vmem_bytes = fixed_bytes + _round_up(tn, _SUBLANE) * row_bytes
    return tn, vmem_bytes


def _relation_attention_kernel(w_ref, ws_ref, *rest, num_rel, alpha):
    """One N-tile per grid step.

    Refs: w_ref (Fin, Fout) stream dtype (resident)
          ws_ref (2, Fin) f32: row 0 = W@s1, row 1 = W@s2 (resident)
          x_0..x_{K-1} (TN, Fin) stream dtype (t_input, then o_list)
          o_ref (TN, Fout) f32
    """
    K = num_rel + 1
    x_refs = rest[:K]
    o_ref = rest[K]
    tn, fin = x_refs[0].shape
    f32 = jnp.float32

    # Hoist the ws broadcasts (JAX does not CSE broadcast_in_dim per loop use).
    ws1 = jnp.broadcast_to(ws_ref[0:1, :], (tn, fin))
    ws2 = jnp.broadcast_to(ws_ref[1:2, :], (tn, fin))

    def leaky(v):
        return jnp.where(v >= 0, v, alpha * v)

    x_t = x_refs[0][...].astype(f32)
    a_t = jnp.sum(x_t * ws1, axis=-1, keepdims=True)             # h_t·s1, (TN,1)

    # Slot 0 pairs h_t with itself: e_0 = LeakyReLU(h_t·s1 + h_t·s2).
    m = leaky(a_t + jnp.sum(x_t * ws2, axis=-1, keepdims=True))  # running max
    denom = jnp.ones((tn, 1), f32)                               # exp(e_0 - m) = 1
    x_mix = x_t                                                  # 1 * x_0

    # Online softmax over the remaining relation slots: each x_k is handled in
    # one unrolled step; only m / denom / x_mix stay live across steps.
    for k in range(1, K):
        xk = x_refs[k][...].astype(f32)
        e_k = leaky(a_t + jnp.sum(xk * ws2, axis=-1, keepdims=True))
        m_new = jnp.maximum(m, e_k)
        scale = jnp.exp(m - m_new)
        p = jnp.exp(e_k - m_new)
        denom = denom * scale + p
        x_mix = x_mix * scale + p * xk
        m = m_new

    # Exact normalisation ((TN,1) divide, negligible), then one MXU matmul in
    # the stream dtype with f32 accumulation.
    x_mix = x_mix * (1.0 / denom)
    o_ref[...] = jnp.dot(x_mix.astype(w_ref.dtype), w_ref[...],
                         preferred_element_type=jnp.float32).astype(o_ref.dtype)


def relation_attention(t_input, o_list, W, s, *, alpha, block_n=512):
    """Pallas wrapper: no padding / no dtype round-trip on the big inputs;
    tiny ws = [W@s1, W@s2] precompute; 1-D pipelined grid over N."""
    N, Fin = t_input.shape
    Fout = W.shape[1]
    xs = [t_input] + list(o_list)
    K = len(xs)
    dtype = xs[0].dtype
    xs = [x if x.dtype == dtype else x.astype(dtype) for x in xs]

    # Tiny precompute (f32): ws[0] = W @ s1, ws[1] = W @ s2  -> (2, Fin).
    w32 = W.astype(jnp.float32)
    s32 = s.astype(jnp.float32)
    ws = jnp.stack([w32 @ s32[:Fout, 0], w32 @ s32[Fout:, 0]], axis=0)
    w_in = W if W.dtype == dtype else W.astype(dtype)            # tiny cast only

    tn, vmem_need = _choose_tile_n(N, K, Fin, Fout, jnp.dtype(dtype).itemsize,
                                   block_n, _VMEM_TILE_BUDGET)
    grid = (pl.cdiv(N, tn),)
    vmem_limit = int(min(max(vmem_need * 2, 32 << 20), 48 << 20))

    kernel = functools.partial(_relation_attention_kernel,
                               num_rel=K - 1, alpha=float(alpha))

    out = pl.pallas_call(
        kernel,
        out_shape=jax.ShapeDtypeStruct((N, Fout), jnp.float32),
        grid=grid,
        in_specs=[
            pl.BlockSpec((Fin, Fout), lambda i: (0, 0)),         # W   (resident)
            pl.BlockSpec((2, Fin), lambda i: (0, 0)),            # ws  (resident)
        ] + [
            pl.BlockSpec((tn, Fin), lambda i: (i, 0))            # x_k N-tiles
            for _ in range(K)
        ],
        out_specs=pl.BlockSpec((tn, Fout), lambda i: (i, 0)),
        compiler_params=pltpu.CompilerParams(
            dimension_semantics=("parallel",),                   # v7x: 2 TCs
            vmem_limit_bytes=vmem_limit,
        ),
    )(w_in, ws, *xs)
    return out


def _xavier_uniform(key, shape, gain):
    fan_in, fan_out = shape[0], shape[1]
    bound = gain * math.sqrt(6.0 / (fan_in + fan_out))
    return jax.random.uniform(key, shape, jnp.float32, -bound, bound)


if __name__ == "__main__":
    # Small shapes consistent with the module: N nodes, Fin -> Fout, R relations.
    # N=200 exercises the multi-step grid + ragged last block; Fin/Fout are
    # deliberately not multiples of 128 to exercise the no-padding path.
    N, Fin, Fout, R = 200, 96, 64, 3
    alpha, gain = 0.2, 1.414

    key = jax.random.PRNGKey(0)
    k_t, k_o, k_w, k_s, k_b = jax.random.split(key, 5)

    t_input = jax.random.normal(k_t, (N, Fin), jnp.float32)
    o_list = [jax.random.normal(jax.random.fold_in(k_o, r), (N, Fin), jnp.float32)
              for r in range(R)]

    # Deterministic parameters (matches __init__ shapes & xavier_uniform gain).
    W = _xavier_uniform(k_w, (Fin, Fout), gain)
    s = _xavier_uniform(k_s, (2 * Fout, 1), gain)
    b = _xavier_uniform(k_b, (1, Fout), gain)   # unused in forward (parity only)
    # TODO(synk): Tanh / Sigmoid / se_dropout from __init__ are never used in
    # forward(), so they have no kernel counterpart.

    # Pure-JAX reference of the PyTorch forward.
    def reference(xs):
        hs = [x @ W for x in xs]
        s1, s2 = s[:Fout, 0], s[Fout:, 0]
        e = jnp.stack([hs[0] @ s1 + h @ s2 for h in hs], axis=1)    # (N, K)
        e = jnp.where(e >= 0, e, alpha * e)                         # LeakyReLU
        att = jax.nn.softmax(e, axis=1)
        return jnp.einsum("nk,nkf->nf", att, jnp.stack(hs, axis=1))

    ref = reference([t_input] + o_list)

    # f32 streaming path (tight tolerance: exact softmax normalisation now).
    out = jax.block_until_ready(relation_attention(t_input, o_list, W, s, alpha=alpha))
    assert out.shape == (N, Fout)
    assert jnp.allclose(out, ref, atol=1e-3, rtol=1e-3), \
        float(jnp.max(jnp.abs(out - ref)))

    # bf16 streaming path (halves HBM bytes + VMEM tiles; looser tolerance by design).
    t16 = t_input.astype(jnp.bfloat16)
    o16 = [o.astype(jnp.bfloat16) for o in o_list]
    out16 = jax.block_until_ready(relation_attention(t16, o16, W, s, alpha=alpha))
    assert out16.shape == (N, Fout)
    assert jnp.allclose(out16, ref, atol=3e-1, rtol=5e-2), \
        float(jnp.max(jnp.abs(out16 - ref)))

    print("KERNEL_OK")
</pallas_src>

<mosaic_0001>
module attributes {stable_mosaic.version = 11 : i64} {
  func.func @_relation_attention_kernel(%arg0: i32, %arg1: memref<96x64xf32, #tpu.memory_space<vmem>>, %arg2: memref<2x96xf32, #tpu.memory_space<vmem>>, %arg3: memref<104x96xf32, #tpu.memory_space<vmem>>, %arg4: memref<104x96xf32, #tpu.memory_space<vmem>>, %arg5: memref<104x96xf32, #tpu.memory_space<vmem>>, %arg6: memref<104x96xf32, #tpu.memory_space<vmem>>, %arg7: memref<104x64xf32, #tpu.memory_space<vmem>>) attributes {dimension_semantics = [#tpu.dimension_semantics<parallel>], iteration_bounds = array<i64: 2>, scalar_prefetch = 0 : i64, scratch_operands = 0 : i64, tpu.core_type = #tpu.core_type<tc>, window_params = [{pipeline_mode = #tpu.pipeline_mode<synchronous>, transform_indices = @transform_0, window_bounds = array<i64: 96, 64>}, {pipeline_mode = #tpu.pipeline_mode<synchronous>, transform_indices = @transform_1, window_bounds = array<i64: 2, 96>}, {transform_indices = @transform_2, window_bounds = array<i64: 104, 96>}, {transform_indices = @transform_3, window_bounds = array<i64: 104, 96>}, {transform_indices = @transform_4, window_bounds = array<i64: 104, 96>}, {transform_indices = @transform_5, window_bounds = array<i64: 104, 96>}, {transform_indices = @transform_6, window_bounds = array<i64: 104, 64>}]} {
    %c0 = arith.constant 0 : index
    %c0_0 = arith.constant 0 : index
    %0 = vector.load %arg2[%c0, %c0_0] : memref<2x96xf32, #tpu.memory_space<vmem>>, vector<1x96xf32>
    %1 = vector.shape_cast %0 : vector<1x96xf32> to vector<1x96xf32>
    %2 = vector.broadcast %1 : vector<1x96xf32> to vector<104x96xf32>
    %c1 = arith.constant 1 : index
    %c0_1 = arith.constant 0 : index
    %3 = vector.load %arg2[%c1, %c0_1] : memref<2x96xf32, #tpu.memory_space<vmem>>, vector<1x96xf32>
    %4 = vector.shape_cast %3 : vector<1x96xf32> to vector<1x96xf32>
    %5 = vector.broadcast %4 : vector<1x96xf32> to vector<104x96xf32>
    %c0_2 = arith.constant 0 : index
    %c0_3 = arith.constant 0 : index
    %6 = vector.load %arg3[%c0_2, %c0_3] : memref<104x96xf32, #tpu.memory_space<vmem>>, vector<104x96xf32>
    %7 = arith.mulf %6, %2 : vector<104x96xf32>
    %cst = arith.constant dense<0.000000e+00> : vector<104xf32>
    %8 = vector.multi_reduction <add>, %7, %cst [1] : vector<104x96xf32> to vector<104xf32>
    %9 = vector.shape_cast %8 : vector<104xf32> to vector<104x1xf32>
    %10 = arith.mulf %6, %5 : vector<104x96xf32>
    %cst_4 = arith.constant dense<0.000000e+00> : vector<104xf32>
    %11 = vector.multi_reduction <add>, %10, %cst_4 [1] : vector<104x96xf32> to vector<104xf32>
    %12 = vector.shape_cast %11 : vector<104xf32> to vector<104x1xf32>
    %13 = arith.addf %9, %12 : vector<104x1xf32>
    %cst_5 = arith.constant 0.000000e+00 : f32
    %14 = vector.broadcast %cst_5 : f32 to vector<104x1xf32>
    %15 = arith.cmpf oge, %13, %14 : vector<104x1xf32>
    %cst_6 = arith.constant 2.000000e-01 : f32
    %16 = vector.broadcast %cst_6 : f32 to vector<104x1xf32>
    %17 = arith.mulf %16, %13 : vector<104x1xf32>
    %18 = arith.select %15, %13, %17 : vector<104x1xi1>, vector<104x1xf32>
    %cst_7 = arith.constant 1.000000e+00 : f32
    %19 = vector.broadcast %cst_7 : f32 to vector<104x1xf32>
    %c0_8 = arith.constant 0 : index
    %c0_9 = arith.constant 0 : index
    %20 = vector.load %arg4[%c0_8, %c0_9] : memref<104x96xf32, #tpu.memory_space<vmem>>, vector<104x96xf32>
    %21 = arith.mulf %20, %5 : vector<104x96xf32>
    %cst_10 = arith.constant dense<0.000000e+00> : vector<104xf32>
    %22 = vector.multi_reduction <add>, %21, %cst_10 [1] : vector<104x96xf32> to vector<104xf32>
    %23 = vector.shape_cast %22 : vector<104xf32> to vector<104x1xf32>
    %24 = arith.addf %9, %23 : vector<104x1xf32>
    %cst_11 = arith.constant 0.000000e+00 : f32
    %25 = vector.broadcast %cst_11 : f32 to vector<104x1xf32>
    %26 = arith.cmpf oge, %24, %25 : vector<104x1xf32>
    %cst_12 = arith.constant 2.000000e-01 : f32
    %27 = vector.broadcast %cst_12 : f32 to vector<104x1xf32>
    %28 = arith.mulf %27, %24 : vector<104x1xf32>
    %29 = arith.select %26, %24, %28 : vector<104x1xi1>, vector<104x1xf32>
    %30 = arith.maximumf %18, %29 : vector<104x1xf32>
    %31 = arith.subf %18, %30 : vector<104x1xf32>
    %32 = math.exp %31 : vector<104x1xf32>
    %33 = arith.subf %29, %30 : vector<104x1xf32>
    %34 = math.exp %33 : vector<104x1xf32>
    %35 = arith.mulf %19, %32 : vector<104x1xf32>
    %36 = arith.addf %35, %34 : vector<104x1xf32>
    %37 = vector.broadcast %32 : vector<104x1xf32> to vector<104x96xf32>
    %38 = arith.mulf %6, %37 : vector<104x96xf32>
    %39 = vector.broadcast %34 : vector<104x1xf32> to vector<104x96xf32>
    %40 = arith.mulf %39, %20 : vector<104x96xf32>
    %41 = arith.addf %38, %40 : vector<104x96xf32>
    %c0_13 = arith.constant 0 : index
    %c0_14 = arith.constant 0 : index
    %42 = vector.load %arg5[%c0_13, %c0_14] : memref<104x96xf32, #tpu.memory_space<vmem>>, vector<104x96xf32>
    %43 = arith.mulf %42, %5 : vector<104x96xf32>
    %cst_15 = arith.constant dense<0.000000e+00> : vector<104xf32>
    %44 = vector.multi_reduction <add>, %43, %cst_15 [1] : vector<104x96xf32> to vector<104xf32>
    %45 = vector.shape_cast %44 : vector<104xf32> to vector<104x1xf32>
    %46 = arith.addf %9, %45 : vector<104x1xf32>
    %cst_16 = arith.constant 0.000000e+00 : f32
    %47 = vector.broadcast %cst_16 : f32 to vector<104x1xf32>
    %48 = arith.cmpf oge, %46, %47 : vector<104x1xf32>
    %cst_17 = arith.constant 2.000000e-01 : f32
    %49 = vector.broadcast %cst_17 : f32 to vector<104x1xf32>
    %50 = arith.mulf %49, %46 : vector<104x1xf32>
    %51 = arith.select %48, %46, %50 : vector<104x1xi1>, vector<104x1xf32>
    %52 = arith.maximumf %30, %51 : vector<104x1xf32>
    %53 = arith.subf %30, %52 : vector<104x1xf32>
    %54 = math.exp %53 : vector<104x1xf32>
    %55 = arith.subf %51, %52 : vector<104x1xf32>
    %56 = math.exp %55 : vector<104x1xf32>
    %57 = arith.mulf %36, %54 : vector<104x1xf32>
    %58 = arith.addf %57, %56 : vector<104x1xf32>
    %59 = vector.broadcast %54 : vector<104x1xf32> to vector<104x96xf32>
    %60 = arith.mulf %41, %59 : vector<104x96xf32>
    %61 = vector.broadcast %56 : vector<104x1xf32> to vector<104x96xf32>
    %62 = arith.mulf %61, %42 : vector<104x96xf32>
    %63 = arith.addf %60, %62 : vector<104x96xf32>
    %c0_18 = arith.constant 0 : index
    %c0_19 = arith.constant 0 : index
    %64 = vector.load %arg6[%c0_18, %c0_19] : memref<104x96xf32, #tpu.memory_space<vmem>>, vector<104x96xf32>
    %65 = arith.mulf %64, %5 : vector<104x96xf32>
    %cst_20 = arith.constant dense<0.000000e+00> : vector<104xf32>
    %66 = vector.multi_reduction <add>, %65, %cst_20 [1] : vector<104x96xf32> to vector<104xf32>
    %67 = vector.shape_cast %66 : vector<104xf32> to vector<104x1xf32>
    %68 = arith.addf %9, %67 : vector<104x1xf32>
    %cst_21 = arith.constant 0.000000e+00 : f32
    %69 = vector.broadcast %cst_21 : f32 to vector<104x1xf32>
    %70 = arith.cmpf oge, %68, %69 : vector<104x1xf32>
    %cst_22 = arith.constant 2.000000e-01 : f32
    %71 = vector.broadcast %cst_22 : f32 to vector<104x1xf32>
    %72 = arith.mulf %71, %68 : vector<104x1xf32>
    %73 = arith.select %70, %68, %72 : vector<104x1xi1>, vector<104x1xf32>
    %74 = arith.maximumf %52, %73 : vector<104x1xf32>
    %75 = arith.subf %52, %74 : vector<104x1xf32>
    %76 = math.exp %75 : vector<104x1xf32>
    %77 = arith.subf %73, %74 : vector<104x1xf32>
    %78 = math.exp %77 : vector<104x1xf32>
    %79 = arith.mulf %58, %76 : vector<104x1xf32>
    %80 = arith.addf %79, %78 : vector<104x1xf32>
    %81 = vector.broadcast %76 : vector<104x1xf32> to vector<104x96xf32>
    %82 = arith.mulf %63, %81 : vector<104x96xf32>
    %83 = vector.broadcast %78 : vector<104x1xf32> to vector<104x96xf32>
    %84 = arith.mulf %83, %64 : vector<104x96xf32>
    %85 = arith.addf %82, %84 : vector<104x96xf32>
    %cst_23 = arith.constant 1.000000e+00 : f32
    %86 = vector.broadcast %cst_23 : f32 to vector<104x1xf32>
    %87 = arith.divf %86, %80 : vector<104x1xf32>
    %88 = vector.broadcast %87 : vector<104x1xf32> to vector<104x96xf32>
    %89 = arith.mulf %85, %88 : vector<104x96xf32>
    %c0_24 = arith.constant 0 : index
    %c0_25 = arith.constant 0 : index
    %90 = vector.load %arg1[%c0_24, %c0_25] : memref<96x64xf32, #tpu.memory_space<vmem>>, vector<96x64xf32>
    %cst_26 = arith.constant dense<0.000000e+00> : vector<104x64xf32>
    %91 = tpu.matmul %89, %90, %cst_26 {dimension_numbers = #tpu.dot_dimension_numbers<[1], [0], [0], [1], [0, 0, 1, 1], [], []>} : vector<104x96xf32>, vector<96x64xf32>, vector<104x64xf32> -> vector<104x64xf32>
    %c0_27 = arith.constant 0 : index
    %c0_28 = arith.constant 0 : index
    %92 = vector.load %arg7[%c0_27, %c0_28] : memref<104x64xf32, #tpu.memory_space<vmem>>, vector<104x64xf32>
    tpu.vector_store %arg7[%c0_27, %c0_28], %91 {strides = array<i32>} : memref<104x64xf32, #tpu.memory_space<vmem>>, vector<104x64xf32>,
    return
  }
  func.func @transform_0(%arg0: i32) -> (i32, i32) {
    %c0_i32 = arith.constant 0 : i32
    %c0_i32_0 = arith.constant 0 : i32
    %c0_i32_1 = arith.constant 0 : i32
    return %c0_i32, %c0_i32_0 : i32, i32
  }
  func.func @transform_1(%arg0: i32) -> (i32, i32) {
    %c0_i32 = arith.constant 0 : i32
    %c0_i32_0 = arith.constant 0 : i32
    %c0_i32_1 = arith.constant 0 : i32
    return %c0_i32, %c0_i32_0 : i32, i32
  }
  func.func @transform_2(%arg0: i32) -> (i32, i32) {
    %c0_i32 = arith.constant 0 : i32
    %c0_i32_0 = arith.constant 0 : i32
    return %arg0, %c0_i32 : i32, i32
  }
  func.func @transform_3(%arg0: i32) -> (i32, i32) {
    %c0_i32 = arith.constant 0 : i32
    %c0_i32_0 = arith.constant 0 : i32
    return %arg0, %c0_i32 : i32, i32
  }
  func.func @transform_4(%arg0: i32) -> (i32, i32) {
    %c0_i32 = arith.constant 0 : i32
    %c0_i32_0 = arith.constant 0 : i32
    return %arg0, %c0_i32 : i32, i32
  }
  func.func @transform_5(%arg0: i32) -> (i32, i32) {
    %c0_i32 = arith.constant 0 : i32
    %c0_i32_0 = arith.constant 0 : i32
    return %arg0, %c0_i32 : i32, i32
  }
  func.func @transform_6(%arg0: i32) -> (i32, i32) {
    %c0_i32 = arith.constant 0 : i32
    %c0_i32_0 = arith.constant 0 : i32
    return %arg0, %c0_i32 : i32, i32
  }
}

</mosaic_0001>

<llo_original>
// kernel: tpu_custom_call.1
$region0: #{tpu_custom_call.1}
  #allocation0 [shape = 'u32[]', space=smem, size = 0x4, offset = 0x4, fixed_abs, tag = 'smem constant byte address 0x4 - core index']
  #allocation1 [shape = 'u32[72,128]{1,0:T(1,128)}', space=vmem, size = 0x9000, scoped, tag = 'internal scratch']
  %s0 = inlined_call_operand.vmem [shape: f32[96,64], index: 0, kind: input, shape index: {}]
  %s1 = inlined_call_operand.vmem [shape: f32[2,96], index: 1, kind: input, shape index: {}]
  %s2 = inlined_call_operand.vmem [shape: f32[200,96], index: 2, kind: input, shape index: {}]
  %s3 = inlined_call_operand.vmem [shape: f32[200,96], index: 3, kind: input, shape index: {}]
  %s4 = inlined_call_operand.vmem [shape: f32[200,96], index: 4, kind: input, shape index: {}]
  %s5 = inlined_call_operand.vmem [shape: f32[200,96], index: 5, kind: input, shape index: {}]
  %s6 = inlined_call_operand.vmem [shape: f32[200,64], index: 6, kind: output, shape index: {}]
  %s7 = sld [smem:[#allocation0]]
  $region105: #{tpu_custom_call.1} parent=0
    _
  %s9 = ssub.s32 1, %s7
  %s10 = scalar_select 0, %s9, %s7
  $region1: #{tpu_custom_call.1} parent=0
    #allocation2 [shape = 'u8[106496]{0}', space=vmem, size = 0x1a000, scoped, tag = 'output window, operand 0']
    loop: start=0, step=1, limit=4
    $region2: #{tpu_custom_call.1} parent=1 // loop_pre_header
      _
    $region3: #{tpu_custom_call.1} parent=1 // loop_header
      %s12 = sphi 0, %s16
      %p13 = scmp.ge.s32.totalorder %s12, 4
      %s20 = sphi 0, %s20
      %s22 = sphi 0, %s20
      %s23 = sphi 0, %s22
      %s37 = sphi 0, %s23
      %s41 = sphi 0, %s41
      %s43 = sphi 0, %s41
      %s44 = sphi 0, %s43
      %s58 = sphi 0, %s44
      %s64 = sphi 0, %s66
      %s67 = sphi 0, %s64
      %s68 = sphi 0, %s67
      %s84 = sphi 0, %s68
      %s90 = sphi 0, %s92
      %s93 = sphi 0, %s90
      %s94 = sphi 0, %s93
      %s110 = sphi 0, %s94
      %s116 = sphi 0, %s118
      %s119 = sphi 0, %s116
      %s120 = sphi 0, %s119
      %s136 = sphi 0, %s120
      %s142 = sphi 0, %s144
      %s145 = sphi 0, %s142
      %s146 = sphi 0, %s145
      %s162 = sphi 0, %s146
      %s168 = sphi 0, %s170
      %s171 = sphi 0, %s168
      %s172 = sphi 0, %s171
      %s188 = sphi 0, %s172
    $region4: #{tpu_custom_call.1} parent=1 // loop_header_branch
      %15 = sbr.rel (%p13) target = $region8
    $region5: #{tpu_custom_call.1} parent=1 // loop_body
      %s17 = ssub.s32 %s12, 1
      %s18 = ssub.s32 %s12, 2
      %s19 = sadd.s32 %s12, 1
      %s21 = sadd.s32 %s20, 1
      %p24 = scmp.eq.s32.totalorder %s12, 1
      %p25 = scmp.ne.s32.totalorder %s20, %s22
      %p26 = scmp.eq.s32.totalorder %s12, 0
      %p27 = por %p25, %p26
      %p28 = scmp.ne.s32.totalorder %s20, %s22
      %p29 = scmp.eq.s32.totalorder %s17, 1
      %p30 = por %p28, %p29
      %p31 = scmp.ne.s32.totalorder %s22, %s23
      %p32 = scmp.eq.s32.totalorder %s17, 0
      %p33 = por %p31, %p32
      %p34 = scmp.ne.s32.totalorder %s22, %s23
      %p35 = scmp.eq.s32.totalorder %s18, 1
      %p36 = por %p34, %p35
      %p38 = scmp.ne.s32.totalorder %s23, %s37
      %p39 = scmp.eq.s32.totalorder %s18, 0
      %p40 = por %p38, %p39
      %s42 = sadd.s32 %s41, 1
      %p45 = scmp.eq.s32.totalorder %s12, 1
      %p46 = scmp.ne.s32.totalorder %s41, %s43
      %p47 = scmp.eq.s32.totalorder %s12, 0
      %p48 = por %p46, %p47
      %p49 = scmp.ne.s32.totalorder %s41, %s43
      %p50 = scmp.eq.s32.totalorder %s17, 1
      %p51 = por %p49, %p50
      %p52 = scmp.ne.s32.totalorder %s43, %s44
      %p53 = scmp.eq.s32.totalorder %s17, 0
      %p54 = por %p52, %p53
      %p55 = scmp.ne.s32.totalorder %s43, %s44
      %p56 = scmp.eq.s32.totalorder %s18, 1
      %p57 = por %p55, %p56
      %p59 = scmp.ne.s32.totalorder %s44, %s58
      %p60 = scmp.eq.s32.totalorder %s18, 0
      %p61 = por %p59, %p60
      %s62 = ssub.s32 %s12, %s19
      %p63 = scmp.eq.s32.totalorder %s62, 0
      %s65 = sadd.s32 %s64, 1
      %s66 = scalar_select %p63, %s64, %s65
      %p69 = pneg %p63
      %p70 = scmp.eq.s32.totalorder %s12, 1
      %p71 = por %p69, %p70
      %p72 = scmp.ne.s32.totalorder %s64, %s67
      %p73 = scmp.eq.s32.totalorder %s12, 0
      %p74 = por %p72, %p73
      %p75 = scmp.ne.s32.totalorder %s64, %s67
      %p76 = scmp.eq.s32.totalorder %s17, 1
      %p77 = por %p75, %p76
      %p78 = scmp.ne.s32.totalorder %s67, %s68
      %p79 = scmp.eq.s32.totalorder %s17, 0
      %p80 = por %p78, %p79
      %p81 = scmp.ne.s32.totalorder %s67, %s68
      %p82 = scmp.eq.s32.totalorder %s18, 1
      %p83 = por %p81, %p82
      %p85 = scmp.ne.s32.totalorder %s68, %s84
      %p86 = scmp.eq.s32.totalorder %s18, 0
      %p87 = por %p85, %p86
      %s88 = ssub.s32 %s12, %s19
      %p89 = scmp.eq.s32.totalorder %s88, 0
      %s91 = sadd.s32 %s90, 1
      %s92 = scalar_select %p89, %s90, %s91
      %p95 = pneg %p89
      %p96 = scmp.eq.s32.totalorder %s12, 1
      %p97 = por %p95, %p96
      %p98 = scmp.ne.s32.totalorder %s90, %s93
      %p99 = scmp.eq.s32.totalorder %s12, 0
      %p100 = por %p98, %p99
      %p101 = scmp.ne.s32.totalorder %s90, %s93
      %p102 = scmp.eq.s32.totalorder %s17, 1
      %p103 = por %p101, %p102
      %p104 = scmp.ne.s32.totalorder %s93, %s94
      %p105 = scmp.eq.s32.totalorder %s17, 0
      %p106 = por %p104, %p105
      %p107 = scmp.ne.s32.totalorder %s93, %s94
      %p108 = scmp.eq.s32.totalorder %s18, 1
      %p109 = por %p107, %p108
      %p111 = scmp.ne.s32.totalorder %s94, %s110
      %p112 = scmp.eq.s32.totalorder %s18, 0
      %p113 = por %p111, %p112
      %s114 = ssub.s32 %s12, %s19
      %p115 = scmp.eq.s32.totalorder %s114, 0
      %s117 = sadd.s32 %s116, 1
      %s118 = scalar_select %p115, %s116, %s117
      %p121 = pneg %p115
      %p122 = scmp.eq.s32.totalorder %s12, 1
      %p123 = por %p121, %p122
      %p124 = scmp.ne.s32.totalorder %s116, %s119
      %p125 = scmp.eq.s32.totalorder %s12, 0
      %p126 = por %p124, %p125
      %p127 = scmp.ne.s32.totalorder %s116, %s119
      %p128 = scmp.eq.s32.totalorder %s17, 1
      %p129 = por %p127, %p128
      %p130 = scmp.ne.s32.totalorder %s119, %s120
      %p131 = scmp.eq.s32.totalorder %s17, 0
      %p132 = por %p130, %p131
      %p133 = scmp.ne.s32.totalorder %s119, %s120
      %p134 = scmp.eq.s32.totalorder %s18, 1
      %p135 = por %p133, %p134
      %p137 = scmp.ne.s32.totalorder %s120, %s136
      %p138 = scmp.eq.s32.totalorder %s18, 0
      %p139 = por %p137, %p138
      %s140 = ssub.s32 %s12, %s19
      %p141 = scmp.eq.s32.totalorder %s140, 0
      %s143 = sadd.s32 %s142, 1
      %s144 = scalar_select %p141, %s142, %s143
      %p147 = pneg %p141
      %p148 = scmp.eq.s32.totalorder %s12, 1
      %p149 = por %p147, %p148
      %p150 = scmp.ne.s32.totalorder %s142, %s145
      %p151 = scmp.eq.s32.totalorder %s12, 0
      %p152 = por %p150, %p151
      %p153 = scmp.ne.s32.totalorder %s142, %s145
      %p154 = scmp.eq.s32.totalorder %s17, 1
      %p155 = por %p153, %p154
      %p156 = scmp.ne.s32.totalorder %s145, %s146
      %p157 = scmp.eq.s32.totalorder %s17, 0
      %p158 = por %p156, %p157
      %p159 = scmp.ne.s32.totalorder %s145, %s146
      %p160 = scmp.eq.s32.totalorder %s18, 1
      %p161 = por %p159, %p160
      %p163 = scmp.ne.s32.totalorder %s146, %s162
      %p164 = scmp.eq.s32.totalorder %s18, 0
      %p165 = por %p163, %p164
      %s166 = ssub.s32 %s12, %s19
      %p167 = scmp.eq.s32.totalorder %s166, 0
      %s169 = sadd.s32 %s168, 1
      %s170 = scalar_select %p167, %s168, %s169
      %p173 = pneg %p167
      %p174 = scmp.eq.s32.totalorder %s12, 1
      %p175 = por %p173, %p174
      %p176 = scmp.ne.s32.totalorder %s168, %s171
      %p177 = scmp.eq.s32.totalorder %s12, 0
      %p178 = por %p176, %p177
      %p179 = scmp.ne.s32.totalorder %s168, %s171
      %p180 = scmp.eq.s32.totalorder %s17, 1
      %p181 = por %p179, %p180
      %p182 = scmp.ne.s32.totalorder %s171, %s172
      %p183 = scmp.eq.s32.totalorder %s17, 0
      %p184 = por %p182, %p183
      %p185 = scmp.ne.s32.totalorder %s171, %s172
      %p186 = scmp.eq.s32.totalorder %s18, 1
      %p187 = por %p185, %p186
      %p189 = scmp.ne.s32.totalorder %s172, %s188
      %p190 = scmp.eq.s32.totalorder %s18, 0
      %p191 = por %p189, %p190
      %p192 = scmp.le.s32.totalorder 1, %s12
      %p193 = scmp.lt.s32.totalorder %s12, 3
      %p194 = pnand %p192, %p193
      %p195 = pneg %p194
      // Predicated region
      $region9: #{tpu_custom_call.1} parent=5 // pred_check
        _
      $region10: #{tpu_custom_call.1} parent=5 // pred_check_branch
        %197 = sbr.rel (%p194) target = $region12
      $region11: #{tpu_custom_call.1} parent=5 // pred_region
        %s198 = ssub.s32 %s12, 1
        // Predicated region
        $region13: #{tpu_custom_call.1} parent=11 // pred_check
          %p199 = pneg %p33
        $region14: #{tpu_custom_call.1} parent=11 // pred_check_branch
          %201 = sbr.rel (%p199) target = $region16
        $region15: #{tpu_custom_call.1} parent=11 // pred_region
          _
        $region16: #{tpu_custom_call.1} parent=11 // pred_fallthru
          _
        // Predicated region
        $region17: #{tpu_custom_call.1} parent=11 // pred_check
          %p202 = pneg %p54
        $region18: #{tpu_custom_call.1} parent=11 // pred_check_branch
          %204 = sbr.rel (%p202) target = $region20
        $region19: #{tpu_custom_call.1} parent=11 // pred_region
          _
        $region20: #{tpu_custom_call.1} parent=11 // pred_fallthru
          _
      $region12: #{tpu_custom_call.1} parent=5 // pred_fallthru
        _
      %p205 = scmp.lt.s32.totalorder %s12, 2
      // Predicated region
      $region21: #{tpu_custom_call.1} parent=5 // pred_check
        %p206 = pneg %p205
      $region22: #{tpu_custom_call.1} parent=5 // pred_check_branch
        %208 = sbr.rel (%p206) target = $region24
      $region23: #{tpu_custom_call.1} parent=5 // pred_region
        // Predicated region
        $region25: #{tpu_custom_call.1} parent=23 // pred_check
          %p209 = pneg %p74
        $region26: #{tpu_custom_call.1} parent=23 // pred_check_branch
          %211 = sbr.rel (%p209) target = $region28
        $region27: #{tpu_custom_call.1} parent=23 // pred_region
          %s212 = smul.u32 13, %s12
          %s213 = ssub.s32 25, %s212
          %p214 = scmp.lt.s32.totalorder %s213, 13
          %s215 = scalar_select %p214, %s213, 13
          %s216 = smul.u32 8, %s215
          %p217 = scmp.lt.s32.totalorder %s212, 24
          %s218 = scalar_select %p217, %s212, 24
          %s219 = smul.addr %s218, 8
          %s220 = scalar_lea.vmem %s2, %s219
          %s221 = smul.u32 13, %s12
          %s222 = ssub.s32 25, %s221
          %p223 = scmp.lt.s32.totalorder %s222, 13
          %s224 = scalar_select %p223, %s222, 13
          %s225 = smul.u32 8, %s224
        $region28: #{tpu_custom_call.1} parent=23 // pred_fallthru
          _
        // Predicated region
        $region29: #{tpu_custom_call.1} parent=23 // pred_check
          %p226 = pneg %p100
        $region30: #{tpu_custom_call.1} parent=23 // pred_check_branch
          %228 = sbr.rel (%p226) target = $region32
        $region31: #{tpu_custom_call.1} parent=23 // pred_region
          %s229 = smul.u32 13, %s12
          %s230 = ssub.s32 25, %s229
          %p231 = scmp.lt.s32.totalorder %s230, 13
          %s232 = scalar_select %p231, %s230, 13
          %s233 = smul.u32 8, %s232
          %p234 = scmp.lt.s32.totalorder %s229, 24
          %s235 = scalar_select %p234, %s229, 24
          %s236 = smul.addr %s235, 8
          %s237 = scalar_lea.vmem %s3, %s236
          %s238 = smul.u32 13, %s12
          %s239 = ssub.s32 25, %s238
          %p240 = scmp.lt.s32.totalorder %s239, 13
          %s241 = scalar_select %p240, %s239, 13
          %s242 = smul.u32 8, %s241
        $region32: #{tpu_custom_call.1} parent=23 // pred_fallthru
          _
        // Predicated region
        $region33: #{tpu_custom_call.1} parent=23 // pred_check
          %p243 = pneg %p126
        $region34: #{tpu_custom_call.1} parent=23 // pred_check_branch
          %245 = sbr.rel (%p243) target = $region36
        $region35: #{tpu_custom_call.1} parent=23 // pred_region
          %s246 = smul.u32 13, %s12
          %s247 = ssub.s32 25, %s246
          %p248 = scmp.lt.s32.totalorder %s247, 13
          %s249 = scalar_select %p248, %s247, 13
          %s250 = smul.u32 8, %s249
          %p251 = scmp.lt.s32.totalorder %s246, 24
          %s252 = scalar_select %p251, %s246, 24
          %s253 = smul.addr %s252, 8
          %s254 = scalar_lea.vmem %s4, %s253
          %s255 = smul.u32 13, %s12
          %s256 = ssub.s32 25, %s255
          %p257 = scmp.lt.s32.totalorder %s256, 13
          %s258 = scalar_select %p257, %s256, 13
          %s259 = smul.u32 8, %s258
        $region36: #{tpu_custom_call.1} parent=23 // pred_fallthru
          _
        // Predicated region
        $region37: #{tpu_custom_call.1} parent=23 // pred_check
          %p260 = pneg %p152
        $region38: #{tpu_custom_call.1} parent=23 // pred_check_branch
          %262 = sbr.rel (%p260) target = $region40
        $region39: #{tpu_custom_call.1} parent=23 // pred_region
          %s263 = smul.u32 13, %s12
          %s264 = ssub.s32 25, %s263
          %p265 = scmp.lt.s32.totalorder %s264, 13
          %s266 = scalar_select %p265, %s264, 13
          %s267 = smul.u32 8, %s266
          %p268 = scmp.lt.s32.totalorder %s263, 24
          %s269 = scalar_select %p268, %s263, 24
          %s270 = smul.addr %s269, 8
          %s271 = scalar_lea.vmem %s5, %s270
          %s272 = smul.u32 13, %s12
          %s273 = ssub.s32 25, %s272
          %p274 = scmp.lt.s32.totalorder %s273, 13
          %s275 = scalar_select %p274, %s273, 13
          %s276 = smul.u32 8, %s275
        $region40: #{tpu_custom_call.1} parent=23 // pred_fallthru
          _
      $region24: #{tpu_custom_call.1} parent=5 // pred_fallthru
        _
      %p277 = scmp.le.s32.totalorder 1, %s12
      %p278 = scmp.lt.s32.totalorder %s12, 3
      %p279 = pnand %p277, %p278
      %p280 = pneg %p279
      // Predicated region
      $region41: #{tpu_custom_call.1} parent=5 // pred_check
        _
      $region42: #{tpu_custom_call.1} parent=5 // pred_check_branch
        %282 = sbr.rel (%p279) target = $region44
      $region43: #{tpu_custom_call.1} parent=5 // pred_region
        %s283 = ssub.s32 %s12, 1
        %p284 = pneg %p33
        %p285 = pneg %p30
        %p286 = pneg %p54
        %p287 = pneg %p51
        %s288 = smul.u32 13, %s17
        %s289 = ssub.s32 25, %s288
        %p290 = scmp.lt.s32.totalorder %s289, 13
        %s291 = scalar_select %p290, %s289, 13
        %s292 = smul.u32 8, %s291
        %p293 = scmp.lt.s32.totalorder %s288, 24
        %s294 = scalar_select %p293, %s288, 24
        %s295 = smul.addr %s294, 8
        %s296 = scalar_lea.vmem %s2, %s295
        %p297 = pneg %p80
        %p298 = pneg %p77
        %s299 = smul.u32 13, %s17
        %s300 = ssub.s32 25, %s299
        %p301 = scmp.lt.s32.totalorder %s300, 13
        %s302 = scalar_select %p301, %s300, 13
        %s303 = smul.u32 8, %s302
        %p304 = scmp.lt.s32.totalorder %s299, 24
        %s305 = scalar_select %p304, %s299, 24
        %s306 = smul.addr %s305, 8
        %s307 = scalar_lea.vmem %s3, %s306
        %p308 = pneg %p106
        %p309 = pneg %p103
        %s310 = smul.u32 13, %s17
        %s311 = ssub.s32 25, %s310
        %p312 = scmp.lt.s32.totalorder %s311, 13
        %s313 = scalar_select %p312, %s311, 13
        %s314 = smul.u32 8, %s313
        %p315 = scmp.lt.s32.totalorder %s310, 24
        %s316 = scalar_select %p315, %s310, 24
        %s317 = smul.addr %s316, 8
        %s318 = scalar_lea.vmem %s4, %s317
        %p319 = pneg %p132
        %p320 = pneg %p129
        %s321 = smul.u32 13, %s17
        %s322 = ssub.s32 25, %s321
        %p323 = scmp.lt.s32.totalorder %s322, 13
        %s324 = scalar_select %p323, %s322, 13
        %s325 = smul.u32 8, %s324
        %p326 = scmp.lt.s32.totalorder %s321, 24
        %s327 = scalar_select %p326, %s321, 24
        %s328 = smul.addr %s327, 8
        %s329 = scalar_lea.vmem %s5, %s328
        %p330 = pneg %p158
        %p331 = pneg %p155
        %p332 = pneg %p184
        %p333 = pneg %p181
        %s334 = sand.u32 %s171, 1
        %s335 = sand.u32 %s171, 1
        %s336 = smul.addr %s335, 104
        %s337 = scalar_lea.vmem [#allocation2], %s336
        %s338 = smul.u32 13, %s17
        %s339 = ssub.s32 25, %s338
        %p340 = scmp.lt.s32.totalorder %s339, 13
        %s341 = scalar_select %p340, %s339, 13
        %s342 = smul.u32 8, %s341
        %p343 = scmp.lt.s32.totalorder %s338, 24
        %s344 = scalar_select %p343, %s338, 24
        %s345 = smul.addr %s344, 8
        %s346 = scalar_lea.vmem %s2, %s345
        %s347 = smul.u32 13, %s17
        %s348 = ssub.s32 25, %s347
        %p349 = scmp.lt.s32.totalorder %s348, 13
        %s350 = scalar_select %p349, %s348, 13
        %s351 = smul.u32 8, %s350
        %s352 = smul.u32 13, %s17
        %s353 = ssub.s32 25, %s352
        %p354 = scmp.lt.s32.totalorder %s353, 13
        %s355 = scalar_select %p354, %s353, 13
        %s356 = smul.u32 8, %s355
        %p357 = scmp.lt.s32.totalorder %s352, 24
        %s358 = scalar_select %p357, %s352, 24
        %s359 = smul.addr %s358, 8
        %s360 = scalar_lea.vmem %s3, %s359
        %s361 = smul.u32 13, %s17
        %s362 = ssub.s32 25, %s361
        %p363 = scmp.lt.s32.totalorder %s362, 13
        %s364 = scalar_select %p363, %s362, 13
        %s365 = smul.u32 8, %s364
        %s366 = smul.u32 13, %s17
        %s367 = ssub.s32 25, %s366
        %p368 = scmp.lt.s32.totalorder %s367, 13
        %s369 = scalar_select %p368, %s367, 13
        %s370 = smul.u32 8, %s369
        %p371 = scmp.lt.s32.totalorder %s366, 24
        %s372 = scalar_select %p371, %s366, 24
        %s373 = smul.addr %s372, 8
        %s374 = scalar_lea.vmem %s4, %s373
        %s375 = smul.u32 13, %s17
        %s376 = ssub.s32 25, %s375
        %p377 = scmp.lt.s32.totalorder %s376, 13
        %s378 = scalar_select %p377, %s376, 13
        %s379 = smul.u32 8, %s378
        %s380 = smul.u32 13, %s17
        %s381 = ssub.s32 25, %s380
        %p382 = scmp.lt.s32.totalorder %s381, 13
        %s383 = scalar_select %p382, %s381, 13
        %s384 = smul.u32 8, %s383
        %p385 = scmp.lt.s32.totalorder %s380, 24
        %s386 = scalar_select %p385, %s380, 24
        %s387 = smul.addr %s386, 8
        %s388 = scalar_lea.vmem %s5, %s387
        %s389 = smul.u32 13, %s17
        %s390 = ssub.s32 25, %s389
        %p391 = scmp.lt.s32.totalorder %s390, 13
        %s392 = scalar_select %p391, %s390, 13
        %s393 = smul.u32 8, %s392
        %s394 = smul.u32 13, %s17
        %s395 = ssub.s32 25, %s394
        %p396 = scmp.lt.s32.totalorder %s395, 13
        %s397 = scalar_select %p396, %s395, 13
        %s398 = smul.u32 8, %s397
        %v399 = vld [vmem:[%s1] sm:$0x1]
        %v400 = vperm.slane %v399, 0
        %v401 = vld [vmem:[%s1 + $0x1] sm:$0x1]
        %v402 = vperm.slane %v401, 0
        %v403 = vld [vmem:[%s346] sm:$0xff]
        %v404 = vld [vmem:[%s346 + $0x8] sm:$0xff]
        %v405 = vld [vmem:[%s346 + $0x10] sm:$0xff]
        %v406 = vld [vmem:[%s346 + $0x18] sm:$0xff]
        %v407 = vld [vmem:[%s346 + $0x20] sm:$0xff]
        %v408 = vld [vmem:[%s346 + $0x28] sm:$0xff]
        %v409 = vld [vmem:[%s346 + $0x30] sm:$0xff]
        %v410 = vld [vmem:[%s346 + $0x38] sm:$0xff]
        %v411 = vld [vmem:[%s346 + $0x40] sm:$0xff]
        %v412 = vld [vmem:[%s346 + $0x48] sm:$0xff]
        %v413 = vld [vmem:[%s346 + $0x50] sm:$0xff]
        %v414 = vld [vmem:[%s346 + $0x58] sm:$0xff]
        %v415 = vld [vmem:[%s346 + $0x60] sm:$0xff]
        %v416 = vmul.f32 %v403, %v400
        %v417 = vmul.f32 %v404, %v400
        %v418 = vmul.f32 %v405, %v400
        %v419 = vmul.f32 %v406, %v400
        %v420 = vmul.f32 %v407, %v400
        %v421 = vmul.f32 %v408, %v400
        %v422 = vmul.f32 %v409, %v400
        %v423 = vmul.f32 %v410, %v400
        %v424 = vmul.f32 %v411, %v400
        %v425 = vmul.f32 %v412, %v400
        %v426 = vmul.f32 %v413, %v400
        %v427 = vmul.f32 %v414, %v400
        %v428 = vmul.f32 %v415, %v400
        %vm429 = vcmask 785408
        %v430 = vsel %vm429, %v416, 0.0
        %431 = vadd.xlane.f32.xlu0 %v430
        %v432 = vpop.xlane.xlu0 %431
        %v433 = vsel %vm429, %v417, 0.0
        %434 = vadd.xlane.f32.xlu0 %v433
        %v435 = vpop.xlane.xlu0 %434
        %v436 = vsel %vm429, %v418, 0.0
        %437 = vadd.xlane.f32.xlu0 %v436
        %v438 = vpop.xlane.xlu0 %437
        %v439 = vsel %vm429, %v419, 0.0
        %440 = vadd.xlane.f32.xlu0 %v439
        %v441 = vpop.xlane.xlu0 %440
        %v442 = vsel %vm429, %v420, 0.0
        %443 = vadd.xlane.f32.xlu0 %v442
        %v444 = vpop.xlane.xlu0 %443
        %v445 = vsel %vm429, %v421, 0.0
        %446 = vadd.xlane.f32.xlu0 %v445
        %v447 = vpop.xlane.xlu0 %446
        %v448 = vsel %vm429, %v422, 0.0
        %449 = vadd.xlane.f32.xlu0 %v448
        %v450 = vpop.xlane.xlu0 %449
        %v451 = vsel %vm429, %v423, 0.0
        %452 = vadd.xlane.f32.xlu0 %v451
        %v453 = vpop.xlane.xlu0 %452
        %v454 = vsel %vm429, %v424, 0.0
        %455 = vadd.xlane.f32.xlu0 %v454
        %v456 = vpop.xlane.xlu0 %455
        %v457 = vsel %vm429, %v425, 0.0
        %458 = vadd.xlane.f32.xlu0 %v457
        %v459 = vpop.xlane.xlu0 %458
        %v460 = vsel %vm429, %v426, 0.0
        %461 = vadd.xlane.f32.xlu0 %v460
        %v462 = vpop.xlane.xlu0 %461
        %v463 = vsel %vm429, %v427, 0.0
        %464 = vadd.xlane.f32.xlu0 %v463
        %v465 = vpop.xlane.xlu0 %464
        %v466 = vsel %vm429, %v428, 0.0
        %467 = vadd.xlane.f32.xlu0 %v466
        %v468 = vpop.xlane.xlu0 %467
        %v469 = vmul.f32 %v403, %v402
        %v470 = vmul.f32 %v404, %v402
        %v471 = vmul.f32 %v405, %v402
        %v472 = vmul.f32 %v406, %v402
        %v473 = vmul.f32 %v407, %v402
        %v474 = vmul.f32 %v408, %v402
        %v475 = vmul.f32 %v409, %v402
        %v476 = vmul.f32 %v410, %v402
        %v477 = vmul.f32 %v411, %v402
        %v478 = vmul.f32 %v412, %v402
        %v479 = vmul.f32 %v413, %v402
        %v480 = vmul.f32 %v414, %v402
        %v481 = vmul.f32 %v415, %v402
        %v482 = vsel %vm429, %v469, 0.0
        %483 = vadd.xlane.f32.xlu0 %v482
        %v484 = vpop.xlane.xlu0 %483
        %v485 = vsel %vm429, %v470, 0.0
        %486 = vadd.xlane.f32.xlu0 %v485
        %v487 = vpop.xlane.xlu0 %486
        %v488 = vsel %vm429, %v471, 0.0
        %489 = vadd.xlane.f32.xlu0 %v488
        %v490 = vpop.xlane.xlu0 %489
        %v491 = vsel %vm429, %v472, 0.0
        %492 = vadd.xlane.f32.xlu0 %v491
        %v493 = vpop.xlane.xlu0 %492
        %v494 = vsel %vm429, %v473, 0.0
        %495 = vadd.xlane.f32.xlu0 %v494
        %v496 = vpop.xlane.xlu0 %495
        %v497 = vsel %vm429, %v474, 0.0
        %498 = vadd.xlane.f32.xlu0 %v497
        %v499 = vpop.xlane.xlu0 %498
        %v500 = vsel %vm429, %v475, 0.0
        %501 = vadd.xlane.f32.xlu0 %v500
        %v502 = vpop.xlane.xlu0 %501
        %v503 = vsel %vm429, %v476, 0.0
        %504 = vadd.xlane.f32.xlu0 %v503
        %v505 = vpop.xlane.xlu0 %504
        %v506 = vsel %vm429, %v477, 0.0
        %507 = vadd.xlane.f32.xlu0 %v506
        %v508 = vpop.xlane.xlu0 %507
        %v509 = vsel %vm429, %v478, 0.0
        %510 = vadd.xlane.f32.xlu0 %v509
        %v511 = vpop.xlane.xlu0 %510
        %v512 = vsel %vm429, %v479, 0.0
        %513 = vadd.xlane.f32.xlu0 %v512
        %v514 = vpop.xlane.xlu0 %513
        %v515 = vsel %vm429, %v480, 0.0
        %516 = vadd.xlane.f32.xlu0 %v515
        %v517 = vpop.xlane.xlu0 %516
        %v518 = vsel %vm429, %v481, 0.0
        %519 = vadd.xlane.f32.xlu0 %v518
        %v520 = vpop.xlane.xlu0 %519
        %v521 = vadd.f32 %v432, %v484
        %v522 = vadd.f32 %v435, %v487
        %v523 = vadd.f32 %v438, %v490
        %v524 = vadd.f32 %v441, %v493
        %v525 = vadd.f32 %v444, %v496
        %v526 = vadd.f32 %v447, %v499
        %v527 = vadd.f32 %v450, %v502
        %v528 = vadd.f32 %v453, %v505
        %v529 = vadd.f32 %v456, %v508
        %v530 = vadd.f32 %v459, %v511
        %v531 = vadd.f32 %v462, %v514
        %v532 = vadd.f32 %v465, %v517
        %v533 = vadd.f32 %v468, %v520
        %vm534 = vcmp.ge.f32.partialorder %v521, 0.0
        %vm535 = vcmp.ge.f32.partialorder %v522, 0.0
        %vm536 = vcmp.ge.f32.partialorder %v523, 0.0
        %vm537 = vcmp.ge.f32.partialorder %v524, 0.0
        %vm538 = vcmp.ge.f32.partialorder %v525, 0.0
        %vm539 = vcmp.ge.f32.partialorder %v526, 0.0
        %vm540 = vcmp.ge.f32.partialorder %v527, 0.0
        %vm541 = vcmp.ge.f32.partialorder %v528, 0.0
        %vm542 = vcmp.ge.f32.partialorder %v529, 0.0
        %vm543 = vcmp.ge.f32.partialorder %v530, 0.0
        %vm544 = vcmp.ge.f32.partialorder %v531, 0.0
        %vm545 = vcmp.ge.f32.partialorder %v532, 0.0
        %vm546 = vcmp.ge.f32.partialorder %v533, 0.0
        %v547 = vmul.f32 %v521, 0.2
        %v548 = vmul.f32 %v522, 0.2
        %v549 = vmul.f32 %v523, 0.2
        %v550 = vmul.f32 %v524, 0.2
        %v551 = vmul.f32 %v525, 0.2
        %v552 = vmul.f32 %v526, 0.2
        %v553 = vmul.f32 %v527, 0.2
        %v554 = vmul.f32 %v528, 0.2
        %v555 = vmul.f32 %v529, 0.2
        %v556 = vmul.f32 %v530, 0.2
        %v557 = vmul.f32 %v531, 0.2
        %v558 = vmul.f32 %v532, 0.2
        %v559 = vmul.f32 %v533, 0.2
        %v560 = vsel %vm534, %v521, %v547
        %v561 = vsel %vm535, %v522, %v548
        %v562 = vsel %vm536, %v523, %v549
        %v563 = vsel %vm537, %v524, %v550
        %v564 = vsel %vm538, %v525, %v551
        %v565 = vsel %vm539, %v526, %v552
        %v566 = vsel %vm540, %v527, %v553
        %v567 = vsel %vm541, %v528, %v554
        %v568 = vsel %vm542, %v529, %v555
        %v569 = vsel %vm543, %v530, %v556
        %v570 = vsel %vm544, %v531, %v557
        %v571 = vsel %vm545, %v532, %v558
        %v572 = vsel %vm546, %v533, %v559
        %v573 = vld [vmem:[%s360] sm:$0xff]
        %v574 = vld [vmem:[%s360 + $0x8] sm:$0xff]
        %v575 = vld [vmem:[%s360 + $0x10] sm:$0xff]
        %v576 = vld [vmem:[%s360 + $0x18] sm:$0xff]
        %v577 = vld [vmem:[%s360 + $0x20] sm:$0xff]
        %v578 = vld [vmem:[%s360 + $0x28] sm:$0xff]
        %v579 = vld [vmem:[%s360 + $0x30] sm:$0xff]
        %v580 = vld [vmem:[%s360 + $0x38] sm:$0xff]
        %v581 = vld [vmem:[%s360 + $0x40] sm:$0xff]
        %v582 = vld [vmem:[%s360 + $0x48] sm:$0xff]
        %v583 = vld [vmem:[%s360 + $0x50] sm:$0xff]
        %v584 = vld [vmem:[%s360 + $0x58] sm:$0xff]
        %v585 = vld [vmem:[%s360 + $0x60] sm:$0xff]
        %v586 = vmul.f32 %v573, %v402
        %v587 = vmul.f32 %v574, %v402
        %v588 = vmul.f32 %v575, %v402
        %v589 = vmul.f32 %v576, %v402
        %v590 = vmul.f32 %v577, %v402
        %v591 = vmul.f32 %v578, %v402
        %v592 = vmul.f32 %v579, %v402
        %v593 = vmul.f32 %v580, %v402
        %v594 = vmul.f32 %v581, %v402
        %v595 = vmul.f32 %v582, %v402
        %v596 = vmul.f32 %v583, %v402
        %v597 = vmul.f32 %v584, %v402
        %v598 = vmul.f32 %v585, %v402
        %v599 = vsel %vm429, %v586, 0.0
        %600 = vadd.xlane.f32.xlu0 %v599
        %v601 = vpop.xlane.xlu0 %600
        %v602 = vsel %vm429, %v587, 0.0
        %603 = vadd.xlane.f32.xlu0 %v602
        %v604 = vpop.xlane.xlu0 %603
        %v605 = vsel %vm429, %v588, 0.0
        %606 = vadd.xlane.f32.xlu0 %v605
        %v607 = vpop.xlane.xlu0 %606
        %v608 = vsel %vm429, %v589, 0.0
        %609 = vadd.xlane.f32.xlu0 %v608
        %v610 = vpop.xlane.xlu0 %609
        %v611 = vsel %vm429, %v590, 0.0
        %612 = vadd.xlane.f32.xlu0 %v611
        %v613 = vpop.xlane.xlu0 %612
        %v614 = vsel %vm429, %v591, 0.0
        %615 = vadd.xlane.f32.xlu0 %v614
        %v616 = vpop.xlane.xlu0 %615
        %v617 = vsel %vm429, %v592, 0.0
        %618 = vadd.xlane.f32.xlu0 %v617
        %v619 = vpop.xlane.xlu0 %618
        %v620 = vsel %vm429, %v593, 0.0
        %621 = vadd.xlane.f32.xlu0 %v620
        %v622 = vpop.xlane.xlu0 %621
        %v623 = vsel %vm429, %v594, 0.0
        %624 = vadd.xlane.f32.xlu0 %v623
        %v625 = vpop.xlane.xlu0 %624
        %v626 = vsel %vm429, %v595, 0.0
        %627 = vadd.xlane.f32.xlu0 %v626
        %v628 = vpop.xlane.xlu0 %627
        %v629 = vsel %vm429, %v596, 0.0
        %630 = vadd.xlane.f32.xlu0 %v629
        %v631 = vpop.xlane.xlu0 %630
        %v632 = vsel %vm429, %v597, 0.0
        %633 = vadd.xlane.f32.xlu0 %v632
        %v634 = vpop.xlane.xlu0 %633
        %v635 = vsel %vm429, %v598, 0.0
        %636 = vadd.xlane.f32.xlu0 %v635
        %v637 = vpop.xlane.xlu0 %636
        %v638 = vadd.f32 %v432, %v601
        %v639 = vadd.f32 %v435, %v604
        %v640 = vadd.f32 %v438, %v607
        %v641 = vadd.f32 %v441, %v610
        %v642 = vadd.f32 %v444, %v613
        %v643 = vadd.f32 %v447, %v616
        %v644 = vadd.f32 %v450, %v619
        %v645 = vadd.f32 %v453, %v622
        %v646 = vadd.f32 %v456, %v625
        %v647 = vadd.f32 %v459, %v628
        %v648 = vadd.f32 %v462, %v631
        %v649 = vadd.f32 %v465, %v634
        %v650 = vadd.f32 %v468, %v637
        %vm651 = vcmp.ge.f32.partialorder %v638, 0.0
        %vm652 = vcmp.ge.f32.partialorder %v639, 0.0
        %vm653 = vcmp.ge.f32.partialorder %v640, 0.0
        %vm654 = vcmp.ge.f32.partialorder %v641, 0.0
        %vm655 = vcmp.ge.f32.partialorder %v642, 0.0
        %vm656 = vcmp.ge.f32.partialorder %v643, 0.0
        %vm657 = vcmp.ge.f32.partialorder %v644, 0.0
        %vm658 = vcmp.ge.f32.partialorder %v645, 0.0
        %vm659 = vcmp.ge.f32.partialorder %v646, 0.0
        %vm660 = vcmp.ge.f32.partialorder %v647, 0.0
        %vm661 = vcmp.ge.f32.partialorder %v648, 0.0
        %vm662 = vcmp.ge.f32.partialorder %v649, 0.0
        %vm663 = vcmp.ge.f32.partialorder %v650, 0.0
        %v664 = vmul.f32 %v638, 0.2
        %v665 = vmul.f32 %v639, 0.2
        %v666 = vmul.f32 %v640, 0.2
        %v667 = vmul.f32 %v641, 0.2
        %v668 = vmul.f32 %v642, 0.2
        %v669 = vmul.f32 %v643, 0.2
        %v670 = vmul.f32 %v644, 0.2
        %v671 = vmul.f32 %v645, 0.2
        %v672 = vmul.f32 %v646, 0.2
        %v673 = vmul.f32 %v647, 0.2
        %v674 = vmul.f32 %v648, 0.2
        %v675 = vmul.f32 %v649, 0.2
        %v676 = vmul.f32 %v650, 0.2
        %v677 = vsel %vm651, %v638, %v664
        %v678 = vsel %vm652, %v639, %v665
        %v679 = vsel %vm653, %v640, %v666
        %v680 = vsel %vm654, %v641, %v667
        %v681 = vsel %vm655, %v642, %v668
        %v682 = vsel %vm656, %v643, %v669
        %v683 = vsel %vm657, %v644, %v670
        %v684 = vsel %vm658, %v645, %v671
        %v685 = vsel %vm659, %v646, %v672
        %v686 = vsel %vm660, %v647, %v673
        %v687 = vsel %vm661, %v648, %v674
        %v688 = vsel %vm662, %v649, %v675
        %v689 = vsel %vm663, %v650, %v676
        %v690 = vmax.f32 %v560, %v677
        %v691 = vmax.f32 %v561, %v678
        %v692 = vmax.f32 %v562, %v679
        %v693 = vmax.f32 %v563, %v680
        %v694 = vmax.f32 %v564, %v681
        %v695 = vmax.f32 %v565, %v682
        %v696 = vmax.f32 %v566, %v683
        %v697 = vmax.f32 %v567, %v684
        %v698 = vmax.f32 %v568, %v685
        %v699 = vmax.f32 %v569, %v686
        %v700 = vmax.f32 %v570, %v687
        %v701 = vmax.f32 %v571, %v688
        %v702 = vmax.f32 %v572, %v689
        %v703 = vsub.f32 %v560, %v690
        %v704 = vsub.f32 %v561, %v691
        %v705 = vsub.f32 %v562, %v692
        %v706 = vsub.f32 %v563, %v693
        %v707 = vsub.f32 %v564, %v694
        %v708 = vsub.f32 %v565, %v695
        %v709 = vsub.f32 %v566, %v696
        %v710 = vsub.f32 %v567, %v697
        %v711 = vsub.f32 %v568, %v698
        %v712 = vsub.f32 %v569, %v699
        %v713 = vsub.f32 %v570, %v700
        %v714 = vsub.f32 %v571, %v701
        %v715 = vsub.f32 %v572, %v702
        %v716 = vmul.f32 %v703, 1.442695
        %v717 = vpow.pop %v716
        %v718 = vmul.f32 %v704, 1.442695
        %v719 = vpow.pop %v718
        %v720 = vmul.f32 %v705, 1.442695
        %v721 = vpow.pop %v720
        %v722 = vmul.f32 %v706, 1.442695
        %v723 = vpow.pop %v722
        %v724 = vmul.f32 %v707, 1.442695
        %v725 = vpow.pop %v724
        %v726 = vmul.f32 %v708, 1.442695
        %v727 = vpow.pop %v726
        %v728 = vmul.f32 %v709, 1.442695
        %v729 = vpow.pop %v728
        %v730 = vmul.f32 %v710, 1.442695
        %v731 = vpow.pop %v730
        %v732 = vmul.f32 %v711, 1.442695
        %v733 = vpow.pop %v732
        %v734 = vmul.f32 %v712, 1.442695
        %v735 = vpow.pop %v734
        %v736 = vmul.f32 %v713, 1.442695
        %v737 = vpow.pop %v736
        %v738 = vmul.f32 %v714, 1.442695
        %v739 = vpow.pop %v738
        %v740 = vmul.f32 %v715, 1.442695
        %v741 = vpow.pop %v740
        %v742 = vsub.f32 %v677, %v690
        %v743 = vsub.f32 %v678, %v691
        %v744 = vsub.f32 %v679, %v692
        %v745 = vsub.f32 %v680, %v693
        %v746 = vsub.f32 %v681, %v694
        %v747 = vsub.f32 %v682, %v695
        %v748 = vsub.f32 %v683, %v696
        %v749 = vsub.f32 %v684, %v697
        %v750 = vsub.f32 %v685, %v698
        %v751 = vsub.f32 %v686, %v699
        %v752 = vsub.f32 %v687, %v700
        %v753 = vsub.f32 %v688, %v701
        %v754 = vsub.f32 %v689, %v702
        %v755 = vmul.f32 %v742, 1.442695
        %v756 = vpow.pop %v755
        %v757 = vmul.f32 %v743, 1.442695
        %v758 = vpow.pop %v757
        %v759 = vmul.f32 %v744, 1.442695
        %v760 = vpow.pop %v759
        %v761 = vmul.f32 %v745, 1.442695
        %v762 = vpow.pop %v761
        %v763 = vmul.f32 %v746, 1.442695
        %v764 = vpow.pop %v763
        %v765 = vmul.f32 %v747, 1.442695
        %v766 = vpow.pop %v765
        %v767 = vmul.f32 %v748, 1.442695
        %v768 = vpow.pop %v767
        %v769 = vmul.f32 %v749, 1.442695
        %v770 = vpow.pop %v769
        %v771 = vmul.f32 %v750, 1.442695
        %v772 = vpow.pop %v771
        %v773 = vmul.f32 %v751, 1.442695
        %v774 = vpow.pop %v773
        %v775 = vmul.f32 %v752, 1.442695
        %v776 = vpow.pop %v775
        %v777 = vmul.f32 %v753, 1.442695
        %v778 = vpow.pop %v777
        %v779 = vmul.f32 %v754, 1.442695
        %v780 = vpow.pop %v779
        %v781 = vadd.f32 %v717, %v756
        %v782 = vadd.f32 %v719, %v758
        %v783 = vadd.f32 %v721, %v760
        %v784 = vadd.f32 %v723, %v762
        %v785 = vadd.f32 %v725, %v764
        %v786 = vadd.f32 %v727, %v766
        %v787 = vadd.f32 %v729, %v768
        %v788 = vadd.f32 %v731, %v770
        %v789 = vadd.f32 %v733, %v772
        %v790 = vadd.f32 %v735, %v774
        %v791 = vadd.f32 %v737, %v776
        %v792 = vadd.f32 %v739, %v778
        %v793 = vadd.f32 %v741, %v780
        %v794 = vmul.f32 %v403, %v717
        %v795 = vmul.f32 %v404, %v719
        %v796 = vmul.f32 %v405, %v721
        %v797 = vmul.f32 %v406, %v723
        %v798 = vmul.f32 %v407, %v725
        %v799 = vmul.f32 %v408, %v727
        %v800 = vmul.f32 %v409, %v729
        %v801 = vmul.f32 %v410, %v731
        %v802 = vmul.f32 %v411, %v733
        %v803 = vmul.f32 %v412, %v735
        %v804 = vmul.f32 %v413, %v737
        %v805 = vmul.f32 %v414, %v739
        %v806 = vmul.f32 %v415, %v741
        %v807 = vmul.f32 %v756, %v573
        %v808 = vmul.f32 %v758, %v574
        %v809 = vmul.f32 %v760, %v575
        %v810 = vmul.f32 %v762, %v576
        %v811 = vmul.f32 %v764, %v577
        %v812 = vmul.f32 %v766, %v578
        %v813 = vmul.f32 %v768, %v579
        %v814 = vmul.f32 %v770, %v580
        %v815 = vmul.f32 %v772, %v581
        %v816 = vmul.f32 %v774, %v582
        %v817 = vmul.f32 %v776, %v583
        %v818 = vmul.f32 %v778, %v584
        %v819 = vmul.f32 %v780, %v585
        %v820 = vadd.f32 %v794, %v807
        %v821 = vadd.f32 %v795, %v808
        %v822 = vadd.f32 %v796, %v809
        %v823 = vadd.f32 %v797, %v810
        %v824 = vadd.f32 %v798, %v811
        %v825 = vadd.f32 %v799, %v812
        %v826 = vadd.f32 %v800, %v813
        %v827 = vadd.f32 %v801, %v814
        %v828 = vadd.f32 %v802, %v815
        %v829 = vadd.f32 %v803, %v816
        %v830 = vadd.f32 %v804, %v817
        %v831 = vadd.f32 %v805, %v818
        %v832 = vadd.f32 %v806, %v819
        %v833 = vld [vmem:[%s374] sm:$0xff]
        %v834 = vld [vmem:[%s374 + $0x8] sm:$0xff]
        %v835 = vld [vmem:[%s374 + $0x10] sm:$0xff]
        %v836 = vld [vmem:[%s374 + $0x18] sm:$0xff]
        %v837 = vld [vmem:[%s374 + $0x20] sm:$0xff]
        %v838 = vld [vmem:[%s374 + $0x28] sm:$0xff]
        %v839 = vld [vmem:[%s374 + $0x30] sm:$0xff]
        %v840 = vld [vmem:[%s374 + $0x38] sm:$0xff]
        %v841 = vld [vmem:[%s374 + $0x40] sm:$0xff]
        %v842 = vld [vmem:[%s374 + $0x48] sm:$0xff]
        %v843 = vld [vmem:[%s374 + $0x50] sm:$0xff]
        %v844 = vld [vmem:[%s374 + $0x58] sm:$0xff]
        %v845 = vld [vmem:[%s374 + $0x60] sm:$0xff]
        %v846 = vmul.f32 %v833, %v402
        %v847 = vmul.f32 %v834, %v402
        %v848 = vmul.f32 %v835, %v402
        %v849 = vmul.f32 %v836, %v402
        %v850 = vmul.f32 %v837, %v402
        %v851 = vmul.f32 %v838, %v402
        %v852 = vmul.f32 %v839, %v402
        %v853 = vmul.f32 %v840, %v402
        %v854 = vmul.f32 %v841, %v402
        %v855 = vmul.f32 %v842, %v402
        %v856 = vmul.f32 %v843, %v402
        %v857 = vmul.f32 %v844, %v402
        %v858 = vmul.f32 %v845, %v402
        %v859 = vsel %vm429, %v846, 0.0
        %860 = vadd.xlane.f32.xlu0 %v859
        %v861 = vpop.xlane.xlu0 %860
        %v862 = vsel %vm429, %v847, 0.0
        %863 = vadd.xlane.f32.xlu0 %v862
        %v864 = vpop.xlane.xlu0 %863
        %v865 = vsel %vm429, %v848, 0.0
        %866 = vadd.xlane.f32.xlu0 %v865
        %v867 = vpop.xlane.xlu0 %866
        %v868 = vsel %vm429, %v849, 0.0
        %869 = vadd.xlane.f32.xlu0 %v868
        %v870 = vpop.xlane.xlu0 %869
        %v871 = vsel %vm429, %v850, 0.0
        %872 = vadd.xlane.f32.xlu0 %v871
        %v873 = vpop.xlane.xlu0 %872
        %v874 = vsel %vm429, %v851, 0.0
        %875 = vadd.xlane.f32.xlu0 %v874
        %v876 = vpop.xlane.xlu0 %875
        %v877 = vsel %vm429, %v852, 0.0
        %878 = vadd.xlane.f32.xlu0 %v877
        %v879 = vpop.xlane.xlu0 %878
        %v880 = vsel %vm429, %v853, 0.0
        %881 = vadd.xlane.f32.xlu0 %v880
        %v882 = vpop.xlane.xlu0 %881
        %v883 = vsel %vm429, %v854, 0.0
        %884 = vadd.xlane.f32.xlu0 %v883
        %v885 = vpop.xlane.xlu0 %884
        %v886 = vsel %vm429, %v855, 0.0
        %887 = vadd.xlane.f32.xlu0 %v886
        %v888 = vpop.xlane.xlu0 %887
        %v889 = vsel %vm429, %v856, 0.0
        %890 = vadd.xlane.f32.xlu0 %v889
        %v891 = vpop.xlane.xlu0 %890
        %v892 = vsel %vm429, %v857, 0.0
        %893 = vadd.xlane.f32.xlu0 %v892
        %v894 = vpop.xlane.xlu0 %893
        %v895 = vsel %vm429, %v858, 0.0
        %896 = vadd.xlane.f32.xlu0 %v895
        %v897 = vpop.xlane.xlu0 %896
        %v898 = vadd.f32 %v432, %v861
        %v899 = vadd.f32 %v435, %v864
        %v900 = vadd.f32 %v438, %v867
        %v901 = vadd.f32 %v441, %v870
        %v902 = vadd.f32 %v444, %v873
        %v903 = vadd.f32 %v447, %v876
        %v904 = vadd.f32 %v450, %v879
        %v905 = vadd.f32 %v453, %v882
        %v906 = vadd.f32 %v456, %v885
        %v907 = vadd.f32 %v459, %v888
        %v908 = vadd.f32 %v462, %v891
        %v909 = vadd.f32 %v465, %v894
        %v910 = vadd.f32 %v468, %v897
        %vm911 = vcmp.ge.f32.partialorder %v898, 0.0
        %vm912 = vcmp.ge.f32.partialorder %v899, 0.0
        %vm913 = vcmp.ge.f32.partialorder %v900, 0.0
        %vm914 = vcmp.ge.f32.partialorder %v901, 0.0
        %vm915 = vcmp.ge.f32.partialorder %v902, 0.0
        %vm916 = vcmp.ge.f32.partialorder %v903, 0.0
        %vm917 = vcmp.ge.f32.partialorder %v904, 0.0
        %vm918 = vcmp.ge.f32.partialorder %v905, 0.0
        %vm919 = vcmp.ge.f32.partialorder %v906, 0.0
        %vm920 = vcmp.ge.f32.partialorder %v907, 0.0
        %vm921 = vcmp.ge.f32.partialorder %v908, 0.0
        %vm922 = vcmp.ge.f32.partialorder %v909, 0.0
        %vm923 = vcmp.ge.f32.partialorder %v910, 0.0
        %v924 = vmul.f32 %v898, 0.2
        %v925 = vmul.f32 %v899, 0.2
        %v926 = vmul.f32 %v900, 0.2
        %v927 = vmul.f32 %v901, 0.2
        %v928 = vmul.f32 %v902, 0.2
        %v929 = vmul.f32 %v903, 0.2
        %v930 = vmul.f32 %v904, 0.2
        %v931 = vmul.f32 %v905, 0.2
        %v932 = vmul.f32 %v906, 0.2
        %v933 = vmul.f32 %v907, 0.2
        %v934 = vmul.f32 %v908, 0.2
        %v935 = vmul.f32 %v909, 0.2
        %v936 = vmul.f32 %v910, 0.2
        %v937 = vsel %vm911, %v898, %v924
        %v938 = vsel %vm912, %v899, %v925
        %v939 = vsel %vm913, %v900, %v926
        %v940 = vsel %vm914, %v901, %v927
        %v941 = vsel %vm915, %v902, %v928
        %v942 = vsel %vm916, %v903, %v929
        %v943 = vsel %vm917, %v904, %v930
        %v944 = vsel %vm918, %v905, %v931
        %v945 = vsel %vm919, %v906, %v932
        %v946 = vsel %vm920, %v907, %v933
        %v947 = vsel %vm921, %v908, %v934
        %v948 = vsel %vm922, %v909, %v935
        %v949 = vsel %vm923, %v910, %v936
        %v950 = vmax.f32 %v690, %v937
        %v951 = vmax.f32 %v691, %v938
        %v952 = vmax.f32 %v692, %v939
        %v953 = vmax.f32 %v693, %v940
        %v954 = vmax.f32 %v694, %v941
        %v955 = vmax.f32 %v695, %v942
        %v956 = vmax.f32 %v696, %v943
        %v957 = vmax.f32 %v697, %v944
        %v958 = vmax.f32 %v698, %v945
        %v959 = vmax.f32 %v699, %v946
        %v960 = vmax.f32 %v700, %v947
        %v961 = vmax.f32 %v701, %v948
        %v962 = vmax.f32 %v702, %v949
        %v963 = vsub.f32 %v690, %v950
        %v964 = vsub.f32 %v691, %v951
        %v965 = vsub.f32 %v692, %v952
        %v966 = vsub.f32 %v693, %v953
        %v967 = vsub.f32 %v694, %v954
        %v968 = vsub.f32 %v695, %v955
        %v969 = vsub.f32 %v696, %v956
        %v970 = vsub.f32 %v697, %v957
        %v971 = vsub.f32 %v698, %v958
        %v972 = vsub.f32 %v699, %v959
        %v973 = vsub.f32 %v700, %v960
        %v974 = vsub.f32 %v701, %v961
        %v975 = vsub.f32 %v702, %v962
        %v976 = vmul.f32 %v963, 1.442695
        %v977 = vpow.pop %v976
        %v978 = vmul.f32 %v964, 1.442695
        %v979 = vpow.pop %v978
        %v980 = vmul.f32 %v965, 1.442695
        %v981 = vpow.pop %v980
        %v982 = vmul.f32 %v966, 1.442695
        %v983 = vpow.pop %v982
        %v984 = vmul.f32 %v967, 1.442695
        %v985 = vpow.pop %v984
        %v986 = vmul.f32 %v968, 1.442695
        %v987 = vpow.pop %v986
        %v988 = vmul.f32 %v969, 1.442695
        %v989 = vpow.pop %v988
        %v990 = vmul.f32 %v970, 1.442695
        %v991 = vpow.pop %v990
        %v992 = vmul.f32 %v971, 1.442695
        %v993 = vpow.pop %v992
        %v994 = vmul.f32 %v972, 1.442695
        %v995 = vpow.pop %v994
        %v996 = vmul.f32 %v973, 1.442695
        %v997 = vpow.pop %v996
        %v998 = vmul.f32 %v974, 1.442695
        %v999 = vpow.pop %v998
        %v1000 = vmul.f32 %v975, 1.442695
        %v1001 = vpow.pop %v1000
        %v1002 = vsub.f32 %v937, %v950
        %v1003 = vsub.f32 %v938, %v951
        %v1004 = vsub.f32 %v939, %v952
        %v1005 = vsub.f32 %v940, %v953
        %v1006 = vsub.f32 %v941, %v954
        %v1007 = vsub.f32 %v942, %v955
        %v1008 = vsub.f32 %v943, %v956
        %v1009 = vsub.f32 %v944, %v957
        %v1010 = vsub.f32 %v945, %v958
        %v1011 = vsub.f32 %v946, %v959
        %v1012 = vsub.f32 %v947, %v960
        %v1013 = vsub.f32 %v948, %v961
        %v1014 = vsub.f32 %v949, %v962
        %v1015 = vmul.f32 %v1002, 1.442695
        %v1016 = vpow.pop %v1015
        %v1017 = vmul.f32 %v1003, 1.442695
        %v1018 = vpow.pop %v1017
        %v1019 = vmul.f32 %v1004, 1.442695
        %v1020 = vpow.pop %v1019
        %v1021 = vmul.f32 %v1005, 1.442695
        %v1022 = vpow.pop %v1021
        %v1023 = vmul.f32 %v1006, 1.442695
        %v1024 = vpow.pop %v1023
        %v1025 = vmul.f32 %v1007, 1.442695
        %v1026 = vpow.pop %v1025
        %v1027 = vmul.f32 %v1008, 1.442695
        %v1028 = vpow.pop %v1027
        %v1029 = vmul.f32 %v1009, 1.442695
        %v1030 = vpow.pop %v1029
        %v1031 = vmul.f32 %v1010, 1.442695
        %v1032 = vpow.pop %v1031
        %v1033 = vmul.f32 %v1011, 1.442695
        %v1034 = vpow.pop %v1033
        %v1035 = vmul.f32 %v1012, 1.442695
        %v1036 = vpow.pop %v1035
        %v1037 = vmul.f32 %v1013, 1.442695
        %v1038 = vpow.pop %v1037
        %v1039 = vmul.f32 %v1014, 1.442695
        %v1040 = vpow.pop %v1039
        %v1041 = vmul.f32 %v781, %v977
        %v1042 = vmul.f32 %v782, %v979
        %v1043 = vmul.f32 %v783, %v981
        %v1044 = vmul.f32 %v784, %v983
        %v1045 = vmul.f32 %v785, %v985
        %v1046 = vmul.f32 %v786, %v987
        %v1047 = vmul.f32 %v787, %v989
        %v1048 = vmul.f32 %v788, %v991
        %v1049 = vmul.f32 %v789, %v993
        %v1050 = vmul.f32 %v790, %v995
        %v1051 = vmul.f32 %v791, %v997
        %v1052 = vmul.f32 %v792, %v999
        %v1053 = vmul.f32 %v793, %v1001
        %v1054 = vadd.f32 %v1041, %v1016
        %v1055 = vadd.f32 %v1042, %v1018
        %v1056 = vadd.f32 %v1043, %v1020
        %v1057 = vadd.f32 %v1044, %v1022
        %v1058 = vadd.f32 %v1045, %v1024
        %v1059 = vadd.f32 %v1046, %v1026
        %v1060 = vadd.f32 %v1047, %v1028
        %v1061 = vadd.f32 %v1048, %v1030
        %v1062 = vadd.f32 %v1049, %v1032
        %v1063 = vadd.f32 %v1050, %v1034
        %v1064 = vadd.f32 %v1051, %v1036
        %v1065 = vadd.f32 %v1052, %v1038
        %v1066 = vadd.f32 %v1053, %v1040
        %v1067 = vmul.f32 %v820, %v977
        %v1068 = vmul.f32 %v821, %v979
        %v1069 = vmul.f32 %v822, %v981
        %v1070 = vmul.f32 %v823, %v983
        %v1071 = vmul.f32 %v824, %v985
        %v1072 = vmul.f32 %v825, %v987
        %v1073 = vmul.f32 %v826, %v989
        %v1074 = vmul.f32 %v827, %v991
        %v1075 = vmul.f32 %v828, %v993
        %v1076 = vmul.f32 %v829, %v995
        %v1077 = vmul.f32 %v830, %v997
        %v1078 = vmul.f32 %v831, %v999
        %v1079 = vmul.f32 %v832, %v1001
        %v1080 = vmul.f32 %v1016, %v833
        %v1081 = vmul.f32 %v1018, %v834
        %v1082 = vmul.f32 %v1020, %v835
        %v1083 = vmul.f32 %v1022, %v836
        %v1084 = vmul.f32 %v1024, %v837
        %v1085 = vmul.f32 %v1026, %v838
        %v1086 = vmul.f32 %v1028, %v839
        %v1087 = vmul.f32 %v1030, %v840
        %v1088 = vmul.f32 %v1032, %v841
        %v1089 = vmul.f32 %v1034, %v842
        %v1090 = vmul.f32 %v1036, %v843
        %v1091 = vmul.f32 %v1038, %v844
        %v1092 = vmul.f32 %v1040, %v845
        %v1093 = vadd.f32 %v1067, %v1080
        %v1094 = vadd.f32 %v1068, %v1081
        %v1095 = vadd.f32 %v1069, %v1082
        %v1096 = vadd.f32 %v1070, %v1083
        %v1097 = vadd.f32 %v1071, %v1084
        %v1098 = vadd.f32 %v1072, %v1085
        %v1099 = vadd.f32 %v1073, %v1086
        %v1100 = vadd.f32 %v1074, %v1087
        %v1101 = vadd.f32 %v1075, %v1088
        %v1102 = vadd.f32 %v1076, %v1089
        %v1103 = vadd.f32 %v1077, %v1090
        %v1104 = vadd.f32 %v1078, %v1091
        %v1105 = vadd.f32 %v1079, %v1092
        %v1106 = vld [vmem:[%s388] sm:$0xff]
        %v1107 = vld [vmem:[%s388 + $0x8] sm:$0xff]
        %v1108 = vld [vmem:[%s388 + $0x10] sm:$0xff]
        %v1109 = vld [vmem:[%s388 + $0x18] sm:$0xff]
        %v1110 = vld [vmem:[%s388 + $0x20] sm:$0xff]
        %v1111 = vld [vmem:[%s388 + $0x28] sm:$0xff]
        %v1112 = vld [vmem:[%s388 + $0x30] sm:$0xff]
        %v1113 = vld [vmem:[%s388 + $0x38] sm:$0xff]
        %v1114 = vld [vmem:[%s388 + $0x40] sm:$0xff]
        %v1115 = vld [vmem:[%s388 + $0x48] sm:$0xff]
        %v1116 = vld [vmem:[%s388 + $0x50] sm:$0xff]
        %v1117 = vld [vmem:[%s388 + $0x58] sm:$0xff]
        %v1118 = vld [vmem:[%s388 + $0x60] sm:$0xff]
        %v1119 = vmul.f32 %v1106, %v402
        %v1120 = vmul.f32 %v1107, %v402
        %v1121 = vmul.f32 %v1108, %v402
        %v1122 = vmul.f32 %v1109, %v402
        %v1123 = vmul.f32 %v1110, %v402
        %v1124 = vmul.f32 %v1111, %v402
        %v1125 = vmul.f32 %v1112, %v402
        %v1126 = vmul.f32 %v1113, %v402
        %v1127 = vmul.f32 %v1114, %v402
        %v1128 = vmul.f32 %v1115, %v402
        %v1129 = vmul.f32 %v1116, %v402
        %v1130 = vmul.f32 %v1117, %v402
        %v1131 = vmul.f32 %v1118, %v402
        %v1132 = vsel %vm429, %v1119, 0.0
        %1133 = vadd.xlane.f32.xlu0 %v1132
        %v1134 = vpop.xlane.xlu0 %1133
        %v1135 = vsel %vm429, %v1120, 0.0
        %1136 = vadd.xlane.f32.xlu0 %v1135
        %v1137 = vpop.xlane.xlu0 %1136
        %v1138 = vsel %vm429, %v1121, 0.0
        %1139 = vadd.xlane.f32.xlu0 %v1138
        %v1140 = vpop.xlane.xlu0 %1139
        %v1141 = vsel %vm429, %v1122, 0.0
        %1142 = vadd.xlane.f32.xlu0 %v1141
        %v1143 = vpop.xlane.xlu0 %1142
        %v1144 = vsel %vm429, %v1123, 0.0
        %1145 = vadd.xlane.f32.xlu0 %v1144
        %v1146 = vpop.xlane.xlu0 %1145
        %v1147 = vsel %vm429, %v1124, 0.0
        %1148 = vadd.xlane.f32.xlu0 %v1147
        %v1149 = vpop.xlane.xlu0 %1148
        %v1150 = vsel %vm429, %v1125, 0.0
        %1151 = vadd.xlane.f32.xlu0 %v1150
        %v1152 = vpop.xlane.xlu0 %1151
        %v1153 = vsel %vm429, %v1126, 0.0
        %1154 = vadd.xlane.f32.xlu0 %v1153
        %v1155 = vpop.xlane.xlu0 %1154
        %v1156 = vsel %vm429, %v1127, 0.0
        %1157 = vadd.xlane.f32.xlu0 %v1156
        %v1158 = vpop.xlane.xlu0 %1157
        %v1159 = vsel %vm429, %v1128, 0.0
        %1160 = vadd.xlane.f32.xlu0 %v1159
        %v1161 = vpop.xlane.xlu0 %1160
        %v1162 = vsel %vm429, %v1129, 0.0
        %1163 = vadd.xlane.f32.xlu0 %v1162
        %v1164 = vpop.xlane.xlu0 %1163
        %v1165 = vsel %vm429, %v1130, 0.0
        %1166 = vadd.xlane.f32.xlu0 %v1165
        %v1167 = vpop.xlane.xlu0 %1166
        %v1168 = vsel %vm429, %v1131, 0.0
        %1169 = vadd.xlane.f32.xlu0 %v1168
        %v1170 = vpop.xlane.xlu0 %1169
        %v1171 = vadd.f32 %v432, %v1134
        %v1172 = vadd.f32 %v435, %v1137
        %v1173 = vadd.f32 %v438, %v1140
        %v1174 = vadd.f32 %v441, %v1143
        %v1175 = vadd.f32 %v444, %v1146
        %v1176 = vadd.f32 %v447, %v1149
        %v1177 = vadd.f32 %v450, %v1152
        %v1178 = vadd.f32 %v453, %v1155
        %v1179 = vadd.f32 %v456, %v1158
        %v1180 = vadd.f32 %v459, %v1161
        %v1181 = vadd.f32 %v462, %v1164
        %v1182 = vadd.f32 %v465, %v1167
        %v1183 = vadd.f32 %v468, %v1170
        %vm1184 = vcmp.ge.f32.partialorder %v1171, 0.0
        %vm1185 = vcmp.ge.f32.partialorder %v1172, 0.0
        %vm1186 = vcmp.ge.f32.partialorder %v1173, 0.0
        %vm1187 = vcmp.ge.f32.partialorder %v1174, 0.0
        %vm1188 = vcmp.ge.f32.partialorder %v1175, 0.0
        %vm1189 = vcmp.ge.f32.partialorder %v1176, 0.0
        %vm1190 = vcmp.ge.f32.partialorder %v1177, 0.0
        %vm1191 = vcmp.ge.f32.partialorder %v1178, 0.0
        %vm1192 = vcmp.ge.f32.partialorder %v1179, 0.0
        %vm1193 = vcmp.ge.f32.partialorder %v1180, 0.0
        %vm1194 = vcmp.ge.f32.partialorder %v1181, 0.0
        %vm1195 = vcmp.ge.f32.partialorder %v1182, 0.0
        %vm1196 = vcmp.ge.f32.partialorder %v1183, 0.0
        %v1197 = vmul.f32 %v1171, 0.2
        %v1198 = vmul.f32 %v1172, 0.2
        %v1199 = vmul.f32 %v1173, 0.2
        %v1200 = vmul.f32 %v1174, 0.2
        %v1201 = vmul.f32 %v1175, 0.2
        %v1202 = vmul.f32 %v1176, 0.2
        %v1203 = vmul.f32 %v1177, 0.2
        %v1204 = vmul.f32 %v1178, 0.2
        %v1205 = vmul.f32 %v1179, 0.2
        %v1206 = vmul.f32 %v1180, 0.2
        %v1207 = vmul.f32 %v1181, 0.2
        %v1208 = vmul.f32 %v1182, 0.2
        %v1209 = vmul.f32 %v1183, 0.2
        %v1210 = vsel %vm1184, %v1171, %v1197
        %v1211 = vsel %vm1185, %v1172, %v1198
        %v1212 = vsel %vm1186, %v1173, %v1199
        %v1213 = vsel %vm1187, %v1174, %v1200
        %v1214 = vsel %vm1188, %v1175, %v1201
        %v1215 = vsel %vm1189, %v1176, %v1202
        %v1216 = vsel %vm1190, %v1177, %v1203
        %v1217 = vsel %vm1191, %v1178, %v1204
        %v1218 = vsel %vm1192, %v1179, %v1205
        %v1219 = vsel %vm1193, %v1180, %v1206
        %v1220 = vsel %vm1194, %v1181, %v1207
        %v1221 = vsel %vm1195, %v1182, %v1208
        %v1222 = vsel %vm1196, %v1183, %v1209
        %v1223 = vmax.f32 %v950, %v1210
        %v1224 = vmax.f32 %v951, %v1211
        %v1225 = vmax.f32 %v952, %v1212
        %v1226 = vmax.f32 %v953, %v1213
        %v1227 = vmax.f32 %v954, %v1214
        %v1228 = vmax.f32 %v955, %v1215
        %v1229 = vmax.f32 %v956, %v1216
        %v1230 = vmax.f32 %v957, %v1217
        %v1231 = vmax.f32 %v958, %v1218
        %v1232 = vmax.f32 %v959, %v1219
        %v1233 = vmax.f32 %v960, %v1220
        %v1234 = vmax.f32 %v961, %v1221
        %v1235 = vmax.f32 %v962, %v1222
        %v1236 = vsub.f32 %v950, %v1223
        %v1237 = vsub.f32 %v951, %v1224
        %v1238 = vsub.f32 %v952, %v1225
        %v1239 = vsub.f32 %v953, %v1226
        %v1240 = vsub.f32 %v954, %v1227
        %v1241 = vsub.f32 %v955, %v1228
        %v1242 = vsub.f32 %v956, %v1229
        %v1243 = vsub.f32 %v957, %v1230
        %v1244 = vsub.f32 %v958, %v1231
        %v1245 = vsub.f32 %v959, %v1232
        %v1246 = vsub.f32 %v960, %v1233
        %v1247 = vsub.f32 %v961, %v1234
        %v1248 = vsub.f32 %v962, %v1235
        %v1249 = vmul.f32 %v1236, 1.442695
        %v1250 = vpow.pop %v1249
        %v1251 = vmul.f32 %v1237, 1.442695
        %v1252 = vpow.pop %v1251
        %v1253 = vmul.f32 %v1238, 1.442695
        %v1254 = vpow.pop %v1253
        %v1255 = vmul.f32 %v1239, 1.442695
        %v1256 = vpow.pop %v1255
        %v1257 = vmul.f32 %v1240, 1.442695
        %v1258 = vpow.pop %v1257
        %v1259 = vmul.f32 %v1241, 1.442695
        %v1260 = vpow.pop %v1259
        %v1261 = vmul.f32 %v1242, 1.442695
        %v1262 = vpow.pop %v1261
        %v1263 = vmul.f32 %v1243, 1.442695
        %v1264 = vpow.pop %v1263
        %v1265 = vmul.f32 %v1244, 1.442695
        %v1266 = vpow.pop %v1265
        %v1267 = vmul.f32 %v1245, 1.442695
        %v1268 = vpow.pop %v1267
        %v1269 = vmul.f32 %v1246, 1.442695
        %v1270 = vpow.pop %v1269
        %v1271 = vmul.f32 %v1247, 1.442695
        %v1272 = vpow.pop %v1271
        %v1273 = vmul.f32 %v1248, 1.442695
        %v1274 = vpow.pop %v1273
        %v1275 = vsub.f32 %v1210, %v1223
        %v1276 = vsub.f32 %v1211, %v1224
        %v1277 = vsub.f32 %v1212, %v1225
        %v1278 = vsub.f32 %v1213, %v1226
        %v1279 = vsub.f32 %v1214, %v1227
        %v1280 = vsub.f32 %v1215, %v1228
        %v1281 = vsub.f32 %v1216, %v1229
        %v1282 = vsub.f32 %v1217, %v1230
        %v1283 = vsub.f32 %v1218, %v1231
        %v1284 = vsub.f32 %v1219, %v1232
        %v1285 = vsub.f32 %v1220, %v1233
        %v1286 = vsub.f32 %v1221, %v1234
        %v1287 = vsub.f32 %v1222, %v1235
        %v1288 = vmul.f32 %v1275, 1.442695
        %v1289 = vpow.pop %v1288
        %v1290 = vmul.f32 %v1276, 1.442695
        %v1291 = vpow.pop %v1290
        %v1292 = vmul.f32 %v1277, 1.442695
        %v1293 = vpow.pop %v1292
        %v1294 = vmul.f32 %v1278, 1.442695
        %v1295 = vpow.pop %v1294
        %v1296 = vmul.f32 %v1279, 1.442695
        %v1297 = vpow.pop %v1296
        %v1298 = vmul.f32 %v1280, 1.442695
        %v1299 = vpow.pop %v1298
        %v1300 = vmul.f32 %v1281, 1.442695
        %v1301 = vpow.pop %v1300
        %v1302 = vmul.f32 %v1282, 1.442695
        %v1303 = vpow.pop %v1302
        %v1304 = vmul.f32 %v1283, 1.442695
        %v1305 = vpow.pop %v1304
        %v1306 = vmul.f32 %v1284, 1.442695
        %v1307 = vpow.pop %v1306
        %v1308 = vmul.f32 %v1285, 1.442695
        %v1309 = vpow.pop %v1308
        %v1310 = vmul.f32 %v1286, 1.442695
        %v1311 = vpow.pop %v1310
        %v1312 = vmul.f32 %v1287, 1.442695
        %v1313 = vpow.pop %v1312
        %v1314 = vmul.f32 %v1054, %v1250
        %v1315 = vmul.f32 %v1055, %v1252
        %v1316 = vmul.f32 %v1056, %v1254
        %v1317 = vmul.f32 %v1057, %v1256
        %v1318 = vmul.f32 %v1058, %v1258
        %v1319 = vmul.f32 %v1059, %v1260
        %v1320 = vmul.f32 %v1060, %v1262
        %v1321 = vmul.f32 %v1061, %v1264
        %v1322 = vmul.f32 %v1062, %v1266
        %v1323 = vmul.f32 %v1063, %v1268
        %v1324 = vmul.f32 %v1064, %v1270
        %v1325 = vmul.f32 %v1065, %v1272
        %v1326 = vmul.f32 %v1066, %v1274
        %v1327 = vadd.f32 %v1314, %v1289
        %v1328 = vadd.f32 %v1315, %v1291
        %v1329 = vadd.f32 %v1316, %v1293
        %v1330 = vadd.f32 %v1317, %v1295
        %v1331 = vadd.f32 %v1318, %v1297
        %v1332 = vadd.f32 %v1319, %v1299
        %v1333 = vadd.f32 %v1320, %v1301
        %v1334 = vadd.f32 %v1321, %v1303
        %v1335 = vadd.f32 %v1322, %v1305
        %v1336 = vadd.f32 %v1323, %v1307
        %v1337 = vadd.f32 %v1324, %v1309
        %v1338 = vadd.f32 %v1325, %v1311
        %v1339 = vadd.f32 %v1326, %v1313
        %v1340 = vmul.f32 %v1093, %v1250
        %v1341 = vmul.f32 %v1094, %v1252
        %v1342 = vmul.f32 %v1095, %v1254
        %v1343 = vmul.f32 %v1096, %v1256
        %v1344 = vmul.f32 %v1097, %v1258
        %v1345 = vmul.f32 %v1098, %v1260
        %v1346 = vmul.f32 %v1099, %v1262
        %v1347 = vmul.f32 %v1100, %v1264
        %v1348 = vmul.f32 %v1101, %v1266
        %v1349 = vmul.f32 %v1102, %v1268
        %v1350 = vmul.f32 %v1103, %v1270
        %v1351 = vmul.f32 %v1104, %v1272
        %v1352 = vmul.f32 %v1105, %v1274
        %v1353 = vmul.f32 %v1289, %v1106
        %v1354 = vmul.f32 %v1291, %v1107
        %v1355 = vmul.f32 %v1293, %v1108
        %v1356 = vmul.f32 %v1295, %v1109
        %v1357 = vmul.f32 %v1297, %v1110
        %v1358 = vmul.f32 %v1299, %v1111
        %v1359 = vmul.f32 %v1301, %v1112
        %v1360 = vmul.f32 %v1303, %v1113
        %v1361 = vmul.f32 %v1305, %v1114
        %v1362 = vmul.f32 %v1307, %v1115
        %v1363 = vmul.f32 %v1309, %v1116
        %v1364 = vmul.f32 %v1311, %v1117
        %v1365 = vmul.f32 %v1313, %v1118
        %v1366 = vadd.f32 %v1340, %v1353
        %v1367 = vadd.f32 %v1341, %v1354
        %v1368 = vadd.f32 %v1342, %v1355
        %v1369 = vadd.f32 %v1343, %v1356
        %v1370 = vadd.f32 %v1344, %v1357
        %v1371 = vadd.f32 %v1345, %v1358
        %v1372 = vadd.f32 %v1346, %v1359
        %v1373 = vadd.f32 %v1347, %v1360
        %v1374 = vadd.f32 %v1348, %v1361
        %v1375 = vadd.f32 %v1349, %v1362
        %v1376 = vadd.f32 %v1350, %v1363
        %v1377 = vadd.f32 %v1351, %v1364
        %v1378 = vadd.f32 %v1352, %v1365
        %v1379 = vrcp.pop %v1327
        %v1380 = vmul.f32 %v1327, %v1379
        %v1381 = vsub.f32 1.0, %v1380
        %v1382 = vmul.f32 %v1379, %v1381
        %v1383 = vadd.f32 %v1379, %v1382
        %vm1384 = vweird.f32 %v1327
        %vm1385 = vweird.f32 %v1379
        %vm1386 = vmor %vm1384, %vm1385
        %v1387 = vsel %vm1386, %v1379, %v1383
        %v1388 = vand.u32 2147483647, %v1327
        %vm1389 = vcmp.eq.f32.partialorder %v1388, 8.507059e+37
        %v1390 = vand.u32 %v1327, 2147483648
        %v1391 = vor.u32 1.1754944e-38, %v1390
        %v1392 = vsel %vm1389, %v1391, %v1387
        %v1393 = vmul.f32 1.0, %v1392
        %v1394 = vrcp.pop %v1328
        %v1395 = vmul.f32 %v1328, %v1394
        %v1396 = vsub.f32 1.0, %v1395
        %v1397 = vmul.f32 %v1394, %v1396
        %v1398 = vadd.f32 %v1394, %v1397
        %vm1399 = vweird.f32 %v1328
        %vm1400 = vweird.f32 %v1394
        %vm1401 = vmor %vm1399, %vm1400
        %v1402 = vsel %vm1401, %v1394, %v1398
        %v1403 = vand.u32 2147483647, %v1328
        %vm1404 = vcmp.eq.f32.partialorder %v1403, 8.507059e+37
        %v1405 = vand.u32 %v1328, 2147483648
        %v1406 = vor.u32 1.1754944e-38, %v1405
        %v1407 = vsel %vm1404, %v1406, %v1402
        %v1408 = vmul.f32 1.0, %v1407
        %v1409 = vrcp.pop %v1329
        %v1410 = vmul.f32 %v1329, %v1409
        %v1411 = vsub.f32 1.0, %v1410
        %v1412 = vmul.f32 %v1409, %v1411
        %v1413 = vadd.f32 %v1409, %v1412
        %vm1414 = vweird.f32 %v1329
        %vm1415 = vweird.f32 %v1409
        %vm1416 = vmor %vm1414, %vm1415
        %v1417 = vsel %vm1416, %v1409, %v1413
        %v1418 = vand.u32 2147483647, %v1329
        %vm1419 = vcmp.eq.f32.partialorder %v1418, 8.507059e+37
        %v1420 = vand.u32 %v1329, 2147483648
        %v1421 = vor.u32 1.1754944e-38, %v1420
        %v1422 = vsel %vm1419, %v1421, %v1417
        %v1423 = vmul.f32 1.0, %v1422
        %v1424 = vrcp.pop %v1330
        %v1425 = vmul.f32 %v1330, %v1424
        %v1426 = vsub.f32 1.0, %v1425
        %v1427 = vmul.f32 %v1424, %v1426
        %v1428 = vadd.f32 %v1424, %v1427
        %vm1429 = vweird.f32 %v1330
        %vm1430 = vweird.f32 %v1424
        %vm1431 = vmor %vm1429, %vm1430
        %v1432 = vsel %vm1431, %v1424, %v1428
        %v1433 = vand.u32 2147483647, %v1330
        %vm1434 = vcmp.eq.f32.partialorder %v1433, 8.507059e+37
        %v1435 = vand.u32 %v1330, 2147483648
        %v1436 = vor.u32 1.1754944e-38, %v1435
        %v1437 = vsel %vm1434, %v1436, %v1432
        %v1438 = vmul.f32 1.0, %v1437
        %v1439 = vrcp.pop %v1331
        %v1440 = vmul.f32 %v1331, %v1439
        %v1441 = vsub.f32 1.0, %v1440
        %v1442 = vmul.f32 %v1439, %v1441
        %v1443 = vadd.f32 %v1439, %v1442
        %vm1444 = vweird.f32 %v1331
        %vm1445 = vweird.f32 %v1439
        %vm1446 = vmor %vm1444, %vm1445
        %v1447 = vsel %vm1446, %v1439, %v1443
        %v1448 = vand.u32 2147483647, %v1331
        %vm1449 = vcmp.eq.f32.partialorder %v1448, 8.507059e+37
        %v1450 = vand.u32 %v1331, 2147483648
        %v1451 = vor.u32 1.1754944e-38, %v1450
        %v1452 = vsel %vm1449, %v1451, %v1447
        %v1453 = vmul.f32 1.0, %v1452
        %v1454 = vrcp.pop %v1332
        %v1455 = vmul.f32 %v1332, %v1454
        %v1456 = vsub.f32 1.0, %v1455
        %v1457 = vmul.f32 %v1454, %v1456
        %v1458 = vadd.f32 %v1454, %v1457
        %vm1459 = vweird.f32 %v1332
        %vm1460 = vweird.f32 %v1454
        %vm1461 = vmor %vm1459, %vm1460
        %v1462 = vsel %vm1461, %v1454, %v1458
        %v1463 = vand.u32 2147483647, %v1332
        %vm1464 = vcmp.eq.f32.partialorder %v1463, 8.507059e+37
        %v1465 = vand.u32 %v1332, 2147483648
        %v1466 = vor.u32 1.1754944e-38, %v1465
        %v1467 = vsel %vm1464, %v1466, %v1462
        %v1468 = vmul.f32 1.0, %v1467
        %v1469 = vrcp.pop %v1333
        %v1470 = vmul.f32 %v1333, %v1469
        %v1471 = vsub.f32 1.0, %v1470
        %v1472 = vmul.f32 %v1469, %v1471
        %v1473 = vadd.f32 %v1469, %v1472
        %vm1474 = vweird.f32 %v1333
        %vm1475 = vweird.f32 %v1469
        %vm1476 = vmor %vm1474, %vm1475
        %v1477 = vsel %vm1476, %v1469, %v1473
        %v1478 = vand.u32 2147483647, %v1333
        %vm1479 = vcmp.eq.f32.partialorder %v1478, 8.507059e+37
        %v1480 = vand.u32 %v1333, 2147483648
        %v1481 = vor.u32 1.1754944e-38, %v1480
        %v1482 = vsel %vm1479, %v1481, %v1477
        %v1483 = vmul.f32 1.0, %v1482
        %v1484 = vrcp.pop %v1334
        %v1485 = vmul.f32 %v1334, %v1484
        %v1486 = vsub.f32 1.0, %v1485
        %v1487 = vmul.f32 %v1484, %v1486
        %v1488 = vadd.f32 %v1484, %v1487
        %vm1489 = vweird.f32 %v1334
        %vm1490 = vweird.f32 %v1484
        %vm1491 = vmor %vm1489, %vm1490
        %v1492 = vsel %vm1491, %v1484, %v1488
        %v1493 = vand.u32 2147483647, %v1334
        %vm1494 = vcmp.eq.f32.partialorder %v1493, 8.507059e+37
        %v1495 = vand.u32 %v1334, 2147483648
        %v1496 = vor.u32 1.1754944e-38, %v1495
        %v1497 = vsel %vm1494, %v1496, %v1492
        %v1498 = vmul.f32 1.0, %v1497
        %v1499 = vrcp.pop %v1335
        %v1500 = vmul.f32 %v1335, %v1499
        %v1501 = vsub.f32 1.0, %v1500
        %v1502 = vmul.f32 %v1499, %v1501
        %v1503 = vadd.f32 %v1499, %v1502
        %vm1504 = vweird.f32 %v1335
        %vm1505 = vweird.f32 %v1499
        %vm1506 = vmor %vm1504, %vm1505
        %v1507 = vsel %vm1506, %v1499, %v1503
        %v1508 = vand.u32 2147483647, %v1335
        %vm1509 = vcmp.eq.f32.partialorder %v1508, 8.507059e+37
        %v1510 = vand.u32 %v1335, 2147483648
        %v1511 = vor.u32 1.1754944e-38, %v1510
        %v1512 = vsel %vm1509, %v1511, %v1507
        %v1513 = vmul.f32 1.0, %v1512
        %v1514 = vrcp.pop %v1336
        %v1515 = vmul.f32 %v1336, %v1514
        %v1516 = vsub.f32 1.0, %v1515
        %v1517 = vmul.f32 %v1514, %v1516
        %v1518 = vadd.f32 %v1514, %v1517
        %vm1519 = vweird.f32 %v1336
        %vm1520 = vweird.f32 %v1514
        %vm1521 = vmor %vm1519, %vm1520
        %v1522 = vsel %vm1521, %v1514, %v1518
        %v1523 = vand.u32 2147483647, %v1336
        %vm1524 = vcmp.eq.f32.partialorder %v1523, 8.507059e+37
        %v1525 = vand.u32 %v1336, 2147483648
        %v1526 = vor.u32 1.1754944e-38, %v1525
        %v1527 = vsel %vm1524, %v1526, %v1522
        %v1528 = vmul.f32 1.0, %v1527
        %v1529 = vrcp.pop %v1337
        %v1530 = vmul.f32 %v1337, %v1529
        %v1531 = vsub.f32 1.0, %v1530
        %v1532 = vmul.f32 %v1529, %v1531
        %v1533 = vadd.f32 %v1529, %v1532
        %vm1534 = vweird.f32 %v1337
        %vm1535 = vweird.f32 %v1529
        %vm1536 = vmor %vm1534, %vm1535
        %v1537 = vsel %vm1536, %v1529, %v1533
        %v1538 = vand.u32 2147483647, %v1337
        %vm1539 = vcmp.eq.f32.partialorder %v1538, 8.507059e+37
        %v1540 = vand.u32 %v1337, 2147483648
        %v1541 = vor.u32 1.1754944e-38, %v1540
        %v1542 = vsel %vm1539, %v1541, %v1537
        %v1543 = vmul.f32 1.0, %v1542
        %v1544 = vrcp.pop %v1338
        %v1545 = vmul.f32 %v1338, %v1544
        %v1546 = vsub.f32 1.0, %v1545
        %v1547 = vmul.f32 %v1544, %v1546
        %v1548 = vadd.f32 %v1544, %v1547
        %vm1549 = vweird.f32 %v1338
        %vm1550 = vweird.f32 %v1544
        %vm1551 = vmor %vm1549, %vm1550
        %v1552 = vsel %vm1551, %v1544, %v1548
        %v1553 = vand.u32 2147483647, %v1338
        %vm1554 = vcmp.eq.f32.partialorder %v1553, 8.507059e+37
        %v1555 = vand.u32 %v1338, 2147483648
        %v1556 = vor.u32 1.1754944e-38, %v1555
        %v1557 = vsel %vm1554, %v1556, %v1552
        %v1558 = vmul.f32 1.0, %v1557
        %v1559 = vrcp.pop %v1339
        %v1560 = vmul.f32 %v1339, %v1559
        %v1561 = vsub.f32 1.0, %v1560
        %v1562 = vmul.f32 %v1559, %v1561
        %v1563 = vadd.f32 %v1559, %v1562
        %vm1564 = vweird.f32 %v1339
        %vm1565 = vweird.f32 %v1559
        %vm1566 = vmor %vm1564, %vm1565
        %v1567 = vsel %vm1566, %v1559, %v1563
        %v1568 = vand.u32 2147483647, %v1339
        %vm1569 = vcmp.eq.f32.partialorder %v1568, 8.507059e+37
        %v1570 = vand.u32 %v1339, 2147483648
        %v1571 = vor.u32 1.1754944e-38, %v1570
        %v1572 = vsel %vm1569, %v1571, %v1567
        %v1573 = vmul.f32 1.0, %v1572
        %v1574 = vmul.f32 %v1366, %v1393
        %v1575 = vmul.f32 %v1367, %v1408
        %v1576 = vmul.f32 %v1368, %v1423
        %v1577 = vmul.f32 %v1369, %v1438
        %v1578 = vmul.f32 %v1370, %v1453
        %v1579 = vmul.f32 %v1371, %v1468
        %v1580 = vmul.f32 %v1372, %v1483
        %v1581 = vmul.f32 %v1373, %v1498
        %v1582 = vmul.f32 %v1374, %v1513
        %v1583 = vmul.f32 %v1375, %v1528
        %v1584 = vmul.f32 %v1376, %v1543
        %v1585 = vmul.f32 %v1377, %v1558
        %v1586 = vmul.f32 %v1378, %v1573
        %v1587 = vld [vmem:[%s0] sm:$0xff]
        %v1588 = vld [vmem:[%s0 + $0x8] sm:$0xff]
        %v1589 = vld [vmem:[%s0 + $0x10] sm:$0xff]
        %v1590 = vld [vmem:[%s0 + $0x18] sm:$0xff]
        %v1591 = vld [vmem:[%s0 + $0x20] sm:$0xff]
        %v1592 = vld [vmem:[%s0 + $0x28] sm:$0xff]
        %v1593 = vld [vmem:[%s0 + $0x30] sm:$0xff]
        %v1594 = vld [vmem:[%s0 + $0x38] sm:$0xff]
        %v1595 = vld [vmem:[%s0 + $0x40] sm:$0xff]
        %v1596 = vld [vmem:[%s0 + $0x48] sm:$0xff]
        %v1597 = vld [vmem:[%s0 + $0x50] sm:$0xff]
        %v1598 = vld [vmem:[%s0 + $0x58] sm:$0xff]
        %v1600 = vsel %vm429, %v1574, 0
        %v1603 = vsel %vm429, %v1575, 0
        %v1606 = vsel %vm429, %v1576, 0
        %v1609 = vsel %vm429, %v1577, 0
        %v1612 = vsel %vm429, %v1578, 0
        %v1615 = vsel %vm429, %v1579, 0
        %v1618 = vsel %vm429, %v1580, 0
        %v1621 = vsel %vm429, %v1581, 0
        %v1624 = vsel %vm429, %v1582, 0
        %v1627 = vsel %vm429, %v1583, 0
        %v1630 = vsel %vm429, %v1584, 0
        %v1633 = vsel %vm429, %v1585, 0
        %v1636 = vsel %vm429, %v1586, 0
        %1638 = vmatpush.msra.mxu0 0.0
        %1639 = vmatpush.msra.mxu0 0.0
        %1640 = vmatpush.msra.mxu0 0.0
        %1641 = vmatpush.msra.mxu0 0.0
        %1642 = vmatpush.msra.mxu0 %v1598
        %1643 = vmatpush.msra.mxu0 %v1597
        %1644 = vmatpush.msra.mxu0 %v1596
        %1645 = vmatpush.msra.mxu0 %v1595
        %1646 = vmatpush.msra.mxu0 %v1594
        %1647 = vmatpush.msra.mxu0 %v1593
        %1648 = vmatpush.msra.mxu0 %v1592
        %1649 = vmatpush.msra.mxu0 %v1591
        %1650 = vmatpush.msra.mxu0 %v1590
        %1651 = vmatpush.msra.mxu0 %v1589
        %1652 = vmatpush.msra.mxu0 %v1588
        %1653 = vmatpush.msra.mxu0 %v1587
        %1654 = vmatmul.f32.gmra.mxu0 %v1600
        %v1655 = vpop.f32.mrf.mxu0
        %v1656 = vadd.f32 0.0, %v1655
        %1657 = vmatmul.f32.gmra.mxu0 %v1603
        %v1658 = vpop.f32.mrf.mxu0
        %v1659 = vadd.f32 0.0, %v1658
        %1660 = vmatmul.f32.gmra.mxu0 %v1606
        %v1661 = vpop.f32.mrf.mxu0
        %v1662 = vadd.f32 0.0, %v1661
        %1663 = vmatmul.f32.gmra.mxu0 %v1609
        %v1664 = vpop.f32.mrf.mxu0
        %v1665 = vadd.f32 0.0, %v1664
        %1666 = vmatmul.f32.gmra.mxu0 %v1612
        %v1667 = vpop.f32.mrf.mxu0
        %v1668 = vadd.f32 0.0, %v1667
        %1669 = vmatmul.f32.gmra.mxu0 %v1615
        %v1670 = vpop.f32.mrf.mxu0
        %v1671 = vadd.f32 0.0, %v1670
        %1672 = vmatmul.f32.gmra.mxu0 %v1618
        %v1673 = vpop.f32.mrf.mxu0
        %v1674 = vadd.f32 0.0, %v1673
        %1675 = vmatmul.f32.gmra.mxu0 %v1621
        %v1676 = vpop.f32.mrf.mxu0
        %v1677 = vadd.f32 0.0, %v1676
        %1678 = vmatmul.f32.gmra.mxu0 %v1624
        %v1679 = vpop.f32.mrf.mxu0
        %v1680 = vadd.f32 0.0, %v1679
        %1681 = vmatmul.f32.gmra.mxu0 %v1627
        %v1682 = vpop.f32.mrf.mxu0
        %v1683 = vadd.f32 0.0, %v1682
        %1684 = vmatmul.f32.gmra.mxu0 %v1630
        %v1685 = vpop.f32.mrf.mxu0
        %v1686 = vadd.f32 0.0, %v1685
        %1687 = vmatmul.f32.gmra.mxu0 %v1633
        %v1688 = vpop.f32.mrf.mxu0
        %v1689 = vadd.f32 0.0, %v1688
        %1690 = vmatmul.f32.gmra.mxu0 %v1636
        %v1691 = vpop.f32.mrf.mxu0
        %v1692 = vadd.f32 0.0, %v1691
        %1693 = vdwg.mxu0
        %vm1694 = vcmask 523264
        %1695 = vst.msk [vmem:[%s337] sm:$0xff] %vm1694, %v1656
        %1696 = vst.msk [vmem:[%s337 + $0x8] sm:$0xff] %vm1694, %v1659
        %1697 = vst.msk [vmem:[%s337 + $0x10] sm:$0xff] %vm1694, %v1662
        %1698 = vst.msk [vmem:[%s337 + $0x18] sm:$0xff] %vm1694, %v1665
        %1699 = vst.msk [vmem:[%s337 + $0x20] sm:$0xff] %vm1694, %v1668
        %1700 = vst.msk [vmem:[%s337 + $0x28] sm:$0xff] %vm1694, %v1671
        %1701 = vst.msk [vmem:[%s337 + $0x30] sm:$0xff] %vm1694, %v1674
        %1702 = vst.msk [vmem:[%s337 + $0x38] sm:$0xff] %vm1694, %v1677
        %1703 = vst.msk [vmem:[%s337 + $0x40] sm:$0xff] %vm1694, %v1680
        %1704 = vst.msk [vmem:[%s337 + $0x48] sm:$0xff] %vm1694, %v1683
        %1705 = vst.msk [vmem:[%s337 + $0x50] sm:$0xff] %vm1694, %v1686
        %1706 = vst.msk [vmem:[%s337 + $0x58] sm:$0xff] %vm1694, %v1689
        %1707 = vst.msk [vmem:[%s337 + $0x60] sm:$0xff] %vm1694, %v1692
        %s1708 = sand.u32 %s171, 1
        %s1709 = sand.u32 %s171, 1
        %s1710 = smul.addr %s1709, 104
        %s1711 = scalar_lea.vmem [#allocation2], %s1710
        // Predicated region
        $region45: #{tpu_custom_call.1} parent=43 // pred_check
          %p1712 = pneg %p181
        $region46: #{tpu_custom_call.1} parent=43 // pred_check_branch
          %1714 = sbr.rel (%p1712) target = $region48
        $region47: #{tpu_custom_call.1} parent=43 // pred_region
          %s1715 = smul.u32 13, %s17
          %s1716 = ssub.s32 25, %s1715
          %p1717 = scmp.lt.s32.totalorder %s1716, 13
          %s1718 = scalar_select %p1717, %s1716, 13
          %s1719 = smul.u32 8, %s1718
          %p1720 = scmp.ne.s32.totalorder 0, %s1719
          %s1721 = smul.addr %s1715, 8
          %s1722 = scalar_lea.vmem %s6, %s1721
          // Predicated region
          $region49: #{tpu_custom_call.1} parent=47 // pred_check
            %p1723 = pneg %p1720
          $region50: #{tpu_custom_call.1} parent=47 // pred_check_branch
            %1725 = sbr.rel (%p1723) target = $region52
          $region51: #{tpu_custom_call.1} parent=47 // pred_region
            // Predicated region
            $region53: #{tpu_custom_call.1} parent=51 // pred_check
              _
            $region54: #{tpu_custom_call.1} parent=51 // pred_check_branch
              %1727 = sbr.rel (0) target = $region56
            $region55: #{tpu_custom_call.1} parent=51 // pred_region
              // Predicated region
              $region75: #{tpu_custom_call.1} parent=55 // pred_check
                _
              $region76: #{tpu_custom_call.1} parent=55 // pred_check_branch
                %1802 = sbr.rel (0) target = $region78
              $region77: #{tpu_custom_call.1} parent=55 // pred_region
                %s1803 = sdiv.u32.pop %s1718, 13
                %s1804 = srem.u32.pop %s1718, 13
                // While loop
                $region79: #{tpu_custom_call.1} parent=77 // loop_pre_header
                  _
                $region80: #{tpu_custom_call.1} parent=77 // loop_header
                  %s1806 = sphi 0, %s1808
                  %p1807 = scmp.ge.s32.totalorder %s1806, %s1803
                  %s1811 = sphi 0, %s1842
                  %s1812 = sphi %s1711, %s1845
                  %s1813 = sphi %s1722, %s1846
                $region81: #{tpu_custom_call.1} parent=77 // loop_header_branch
                  %1810 = sbr.rel (%p1807) target = $region85
                $region82: #{tpu_custom_call.1} parent=77 // loop_body
                  %v1814 = vld [vmem:[%s1812] sm:$0xff]
                  %1815 = vst [vmem:[%s1813] sm:$0xff] %v1814
                  %v1816 = vld [vmem:[%s1812 + $0x8] sm:$0xff]
                  %1817 = vst [vmem:[%s1813 + $0x8] sm:$0xff] %v1816
                  %v1818 = vld [vmem:[%s1812 + $0x10] sm:$0xff]
                  %1819 = vst [vmem:[%s1813 + $0x10] sm:$0xff] %v1818
                  %v1820 = vld [vmem:[%s1812 + $0x18] sm:$0xff]
                  %1821 = vst [vmem:[%s1813 + $0x18] sm:$0xff] %v1820
                  %v1822 = vld [vmem:[%s1812 + $0x20] sm:$0xff]
                  %1823 = vst [vmem:[%s1813 + $0x20] sm:$0xff] %v1822
                  %v1824 = vld [vmem:[%s1812 + $0x28] sm:$0xff]
                  %1825 = vst [vmem:[%s1813 + $0x28] sm:$0xff] %v1824
                  %v1826 = vld [vmem:[%s1812 + $0x30] sm:$0xff]
                  %1827 = vst [vmem:[%s1813 + $0x30] sm:$0xff] %v1826
                  %v1828 = vld [vmem:[%s1812 + $0x38] sm:$0xff]
                  %1829 = vst [vmem:[%s1813 + $0x38] sm:$0xff] %v1828
                  %v1830 = vld [vmem:[%s1812 + $0x40] sm:$0xff]
                  %1831 = vst [vmem:[%s1813 + $0x40] sm:$0xff] %v1830
                  %v1832 = vld [vmem:[%s1812 + $0x48] sm:$0xff]
                  %1833 = vst [vmem:[%s1813 + $0x48] sm:$0xff] %v1832
                  %v1834 = vld [vmem:[%s1812 + $0x50] sm:$0xff]
                  %1835 = vst [vmem:[%s1813 + $0x50] sm:$0xff] %v1834
                  %v1836 = vld [vmem:[%s1812 + $0x58] sm:$0xff]
                  %1837 = vst [vmem:[%s1813 + $0x58] sm:$0xff] %v1836
                  %v1838 = vld [vmem:[%s1812 + $0x60] sm:$0xff]
                  %1839 = vst [vmem:[%s1813 + $0x60] sm:$0xff] %v1838
                  %s1840 = sadd.s32 1, %s1811
                  %p1841 = scmp.ge.s32.totalorder %s1840, %s1803
                  %s1842 = scalar_select %p1841, 0, %s1840
                  %s1843 = smul.u32 %s1842, 104
                  %s1844 = smul.u32 %s1842, 104
                  %s1845 = scalar_lea.vmem %s1711, %s1843 [#allocation2]
                  %s1846 = scalar_lea.vmem %s1722, %s1844
                $region83: #{tpu_custom_call.1} parent=77 // loop_footer
                  %s1808 = sadd.s32 %s1806, 1
                $region84: #{tpu_custom_call.1} parent=77 // loop_footer_branch
                  %1805 = sbr.rel target = $region80
                $region85: #{tpu_custom_call.1} parent=77 // loop_exit
                  _
                %s1847 = sdiv.u32.pop %s1718, 13
                %s1848 = srem.u32.pop %s1718, 13
                %s1849 = smul.u32 %s1847, 13
                %s1850 = smul.u32 8, %s1849
                %s1851 = scalar_lea.vmem %s1711, %s1850 [#allocation2]
                %s1852 = smul.u32 8, %s1849
                %s1853 = scalar_lea.vmem %s1722, %s1852
                // While loop
                $region86: #{tpu_custom_call.1} parent=77 // loop_pre_header
                  _
                $region87: #{tpu_custom_call.1} parent=77 // loop_header
                  %s1855 = sphi 0, %s1857
                  %p1856 = scmp.ge.s32.totalorder %s1855, %s1848
                  %s1860 = sphi 0, %s1867
                  %s1861 = sphi %s1851, %s1870
                  %s1862 = sphi %s1853, %s1871
                $region88: #{tpu_custom_call.1} parent=77 // loop_header_branch
                  %1859 = sbr.rel (%p1856) target = $region92
                $region89: #{tpu_custom_call.1} parent=77 // loop_body
                  %v1863 = vld [vmem:[%s1861] sm:$0xff]
                  %1864 = vst [vmem:[%s1862] sm:$0xff] %v1863
                  %s1865 = sadd.s32 1, %s1860
                  %p1866 = scmp.ge.s32.totalorder %s1865, %s1848
                  %s1867 = scalar_select %p1866, 0, %s1865
                  %s1868 = smul.u32 %s1867, 8
                  %s1869 = smul.u32 %s1867, 8
                  %s1870 = scalar_lea.vmem %s1851, %s1868 [#allocation2]
                  %s1871 = scalar_lea.vmem %s1853, %s1869
                $region90: #{tpu_custom_call.1} parent=77 // loop_footer
                  %s1857 = sadd.s32 %s1855, 1
                $region91: #{tpu_custom_call.1} parent=77 // loop_footer_branch
                  %1854 = sbr.rel target = $region87
                $region92: #{tpu_custom_call.1} parent=77 // loop_exit
                  _
              $region78: #{tpu_custom_call.1} parent=55 // pred_fallthru
                _
              // Predicated region
              $region93: #{tpu_custom_call.1} parent=55 // pred_check
                _
              $region94: #{tpu_custom_call.1} parent=55 // pred_check_branch
                %1873 = sbr.rel target = $region96
              $region95: #{tpu_custom_call.1} parent=55 // pred_region
                _
              $region96: #{tpu_custom_call.1} parent=55 // pred_fallthru
                _
            $region56: #{tpu_custom_call.1} parent=51 // pred_fallthru
              _
            // Predicated region
            $region57: #{tpu_custom_call.1} parent=51 // pred_check
              _
            $region58: #{tpu_custom_call.1} parent=51 // pred_check_branch
              %1729 = sbr.rel target = $region60
            $region59: #{tpu_custom_call.1} parent=51 // pred_region
              %s1731 = ssub.s32 256, 1
              %s1732 = sdiv.u32.pop %s1718, 13
              %s1733 = srem.u32.pop %s1718, 13
              // While loop
              $region61: #{tpu_custom_call.1} parent=59 // loop_pre_header
                _
              $region62: #{tpu_custom_call.1} parent=59 // loop_header
                %s1735 = sphi 0, %s1737
                %p1736 = scmp.ge.s32.totalorder %s1735, %s1732
                %s1740 = sphi 0, %s1771
                %s1741 = sphi %s1711, %s1774
                %s1742 = sphi %s1722, %s1775
              $region63: #{tpu_custom_call.1} parent=59 // loop_header_branch
                %1739 = sbr.rel (%p1736) target = $region67
              $region64: #{tpu_custom_call.1} parent=59 // loop_body
                %v1743 = vld [vmem:[%s1741] sm:%s1731]
                %1744 = vst [vmem:[%s1742] sm:%s1731] %v1743
                %v1745 = vld [vmem:[%s1741 + $0x8] sm:%s1731]
                %1746 = vst [vmem:[%s1742 + $0x8] sm:%s1731] %v1745
                %v1747 = vld [vmem:[%s1741 + $0x10] sm:%s1731]
                %1748 = vst [vmem:[%s1742 + $0x10] sm:%s1731] %v1747
                %v1749 = vld [vmem:[%s1741 + $0x18] sm:%s1731]
                %1750 = vst [vmem:[%s1742 + $0x18] sm:%s1731] %v1749
                %v1751 = vld [vmem:[%s1741 + $0x20] sm:%s1731]
                %1752 = vst [vmem:[%s1742 + $0x20] sm:%s1731] %v1751
                %v1753 = vld [vmem:[%s1741 + $0x28] sm:%s1731]
                %1754 = vst [vmem:[%s1742 + $0x28] sm:%s1731] %v1753
                %v1755 = vld [vmem:[%s1741 + $0x30] sm:%s1731]
                %1756 = vst [vmem:[%s1742 + $0x30] sm:%s1731] %v1755
                %v1757 = vld [vmem:[%s1741 + $0x38] sm:%s1731]
                %1758 = vst [vmem:[%s1742 + $0x38] sm:%s1731] %v1757
                %v1759 = vld [vmem:[%s1741 + $0x40] sm:%s1731]
                %1760 = vst [vmem:[%s1742 + $0x40] sm:%s1731] %v1759
                %v1761 = vld [vmem:[%s1741 + $0x48] sm:%s1731]
                %1762 = vst [vmem:[%s1742 + $0x48] sm:%s1731] %v1761
                %v1763 = vld [vmem:[%s1741 + $0x50] sm:%s1731]
                %1764 = vst [vmem:[%s1742 + $0x50] sm:%s1731] %v1763
                %v1765 = vld [vmem:[%s1741 + $0x58] sm:%s1731]
                %1766 = vst [vmem:[%s1742 + $0x58] sm:%s1731] %v1765
                %v1767 = vld [vmem:[%s1741 + $0x60] sm:%s1731]
                %1768 = vst [vmem:[%s1742 + $0x60] sm:%s1731] %v1767
                %s1769 = sadd.s32 1, %s1740
                %p1770 = scmp.ge.s32.totalorder %s1769, %s1732
                %s1771 = scalar_select %p1770, 0, %s1769
                %s1772 = smul.u32 %s1771, 104
                %s1773 = smul.u32 %s1771, 104
                %s1774 = scalar_lea.vmem %s1711, %s1772 [#allocation2]
                %s1775 = scalar_lea.vmem %s1722, %s1773
              $region65: #{tpu_custom_call.1} parent=59 // loop_footer
                %s1737 = sadd.s32 %s1735, 1
              $region66: #{tpu_custom_call.1} parent=59 // loop_footer_branch
                %1734 = sbr.rel target = $region62
              $region67: #{tpu_custom_call.1} parent=59 // loop_exit
                _
              %s1776 = sdiv.u32.pop %s1718, 13
              %s1777 = srem.u32.pop %s1718, 13
              %s1778 = smul.u32 %s1776, 13
              %s1779 = smul.u32 8, %s1778
              %s1780 = scalar_lea.vmem %s1711, %s1779 [#allocation2]
              %s1781 = smul.u32 8, %s1778
              %s1782 = scalar_lea.vmem %s1722, %s1781
              // While loop
              $region68: #{tpu_custom_call.1} parent=59 // loop_pre_header
                _
              $region69: #{tpu_custom_call.1} parent=59 // loop_header
                %s1784 = sphi 0, %s1786
                %p1785 = scmp.ge.s32.totalorder %s1784, %s1777
                %s1789 = sphi 0, %s1796
                %s1790 = sphi %s1780, %s1799
                %s1791 = sphi %s1782, %s1800
              $region70: #{tpu_custom_call.1} parent=59 // loop_header_branch
                %1788 = sbr.rel (%p1785) target = $region74
              $region71: #{tpu_custom_call.1} parent=59 // loop_body
                %v1792 = vld [vmem:[%s1790] sm:%s1731]
                %1793 = vst [vmem:[%s1791] sm:%s1731] %v1792
                %s1794 = sadd.s32 1, %s1789
                %p1795 = scmp.ge.s32.totalorder %s1794, %s1777
                %s1796 = scalar_select %p1795, 0, %s1794
                %s1797 = smul.u32 %s1796, 8
                %s1798 = smul.u32 %s1796, 8
                %s1799 = scalar_lea.vmem %s1780, %s1797 [#allocation2]
                %s1800 = scalar_lea.vmem %s1782, %s1798
              $region72: #{tpu_custom_call.1} parent=59 // loop_footer
                %s1786 = sadd.s32 %s1784, 1
              $region73: #{tpu_custom_call.1} parent=59 // loop_footer_branch
                %1783 = sbr.rel target = $region69
              $region74: #{tpu_custom_call.1} parent=59 // loop_exit
                _
            $region60: #{tpu_custom_call.1} parent=51 // pred_fallthru
              _
          $region52: #{tpu_custom_call.1} parent=47 // pred_fallthru
            _
          %1874 = vnop
        $region48: #{tpu_custom_call.1} parent=43 // pred_fallthru
          _
      $region44: #{tpu_custom_call.1} parent=5 // pred_fallthru
        _
      %p1875 = scmp.le.s32.totalorder 2, %s12
      // Predicated region
      $region97: #{tpu_custom_call.1} parent=5 // pred_check
        %p1876 = pneg %p1875
      $region98: #{tpu_custom_call.1} parent=5 // pred_check_branch
        %1878 = sbr.rel (%p1876) target = $region100
      $region99: #{tpu_custom_call.1} parent=5 // pred_region
        %s1879 = ssub.s32 %s12, 2
        // Predicated region
        $region101: #{tpu_custom_call.1} parent=99 // pred_check
          %p1880 = pneg %p187
        $region102: #{tpu_custom_call.1} parent=99 // pred_check_branch
          %1882 = sbr.rel (%p1880) target = $region104
        $region103: #{tpu_custom_call.1} parent=99 // pred_region
          %s1883 = sand.u32 %s172, 1
          %s1884 = sand.u32 %s172, 1
          %s1885 = smul.addr %s1884, 104
          %s1886 = scalar_lea.vmem [#allocation2], %s1885
        $region104: #{tpu_custom_call.1} parent=99 // pred_fallthru
          _
      $region100: #{tpu_custom_call.1} parent=5 // pred_fallthru
        _
    $region6: #{tpu_custom_call.1} parent=1 // loop_footer
      %s16 = sadd.s32 1, %s12
    $region7: #{tpu_custom_call.1} parent=1 // loop_footer_branch
      %11 = sbr.rel target = $region3
    $region8: #{tpu_custom_call.1} parent=1 // loop_exit
      _

</llo_original>
